<compile_context>
chip_gen: v5e
topology: v5e:2x2
jax: 0.10.0
libtpu: 0.0.40
codegen_flags: <defaults>
</compile_context>

<pallas_src>
import jax
import jax.numpy as jnp
from jax.experimental import pallas as pl
from jax.experimental.pallas import tpu as pltpu

# ---- model constants (from the module __init__ / script config) -----------------
N_SENSORS = 15                         # out_dim
FILTER_H = 5                           # conv filter height
CONV_OUT = N_SENSORS - FILTER_H + 1    # 11 -> LSTMCell input dim
HIDDEN = 16                            # hidden_dim
# on-the-fly normalization constants (Min_Max); deterministic synthetic scalars.
# TODO(synk): if the real model uses per-sensor Min/Max vectors, w_in_eff/b_conv
#             need per-column scaling instead of a single scalar range.
TRAFFIC_MAX = 80.0
TRAFFIC_MIN = 0.0


def _lstm_speed_kernel(x_ref, w_in_ref, whh_ref, b_gate_ref, w_out_ref, b_out_ref,
                       out_ref,
                       gxi_ref, gxf_ref, gxg_ref, gxo_ref, h_hist_ref):
    # x_ref    : (T, Bb, 15)  raw speeds (conv + normalization folded into w_in/b_gate)
    # w_in_ref : (15, 64)     effective input->gate weight
    # whh_ref  : (16, 64)     recurrent weight (W_hh^T)
    # b_gate   : (1, 64)      b_ih + b_hh + conv/normalization bias contribution
    # w_out    : (16, 15), b_out: (1, 15)
    # out_ref  : (T, Bb, 15)
    # scratches: gx{i,f,g,o}_ref, h_hist_ref all (T, Bb, 16) f32
    T, Bb, N = x_ref.shape
    H = HIDDEN

    # ---- hoisted input projection: one well-shaped matmul, done once -------------
    x_flat = x_ref[...].reshape(T * Bb, N)
    gx = jnp.dot(x_flat, w_in_ref[...],
                 preferred_element_type=jnp.float32) + b_gate_ref[...]   # (T*Bb, 64)
    # split gate columns ONCE (not per step) and park them in VMEM scratch
    gxi_ref[...] = gx[:, 0 * H:1 * H].reshape(T, Bb, H)
    gxf_ref[...] = gx[:, 1 * H:2 * H].reshape(T, Bb, H)
    gxg_ref[...] = gx[:, 2 * H:3 * H].reshape(T, Bb, H)
    gxo_ref[...] = gx[:, 3 * H:4 * H].reshape(T, Bb, H)

    # pre-slice recurrent weight columns ONCE so per-step gates are lane-0 aligned
    whh = whh_ref[...]
    whh_i = whh[:, 0 * H:1 * H]
    whh_f = whh[:, 1 * H:2 * H]
    whh_g = whh[:, 2 * H:3 * H]
    whh_o = whh[:, 3 * H:4 * H]

    def step(t, carry):
        h, c = carry
        i_g = jax.nn.sigmoid(
            gxi_ref[t] + jnp.dot(h, whh_i, preferred_element_type=jnp.float32))
        f_g = jax.nn.sigmoid(
            gxf_ref[t] + jnp.dot(h, whh_f, preferred_element_type=jnp.float32))
        g_g = jnp.tanh(
            gxg_ref[t] + jnp.dot(h, whh_g, preferred_element_type=jnp.float32))
        o_g = jax.nn.sigmoid(
            gxo_ref[t] + jnp.dot(h, whh_o, preferred_element_type=jnp.float32))
        c_new = f_g * c + i_g * g_g
        h_new = o_g * jnp.tanh(c_new)
        h_hist_ref[t] = h_new          # output head deferred to after the loop
        return h_new, c_new

    h0 = jnp.zeros((Bb, H), jnp.float32)   # init_hidden(): zeros
    c0 = jnp.zeros((Bb, H), jnp.float32)
    unroll = True if T <= 32 else 8        # avoid vreg blow-up for long sequences
    jax.lax.fori_loop(0, T, step, (h0, c0), unroll=unroll)

    # ---- deferred output head: one batched matmul + sigmoid + de-normalize -------
    h_all = h_hist_ref[...].reshape(T * Bb, H)
    y = jax.nn.sigmoid(
        jnp.dot(h_all, w_out_ref[...], preferred_element_type=jnp.float32)
        + b_out_ref[...])
    out_ref[...] = (y * (TRAFFIC_MAX - TRAFFIC_MIN)
                    + TRAFFIC_MIN).reshape(T, Bb, N)


def _default_b_block(B, T):
    """>=2 batch chunks when possible (2nd TC on v7x), multiple of 8, VMEM-safe."""
    if B < 16:
        return B
    # rough per-batch-row VMEM bytes: in/out blocks double-buffered + 5 scratches
    per_row = T * (N_SENSORS * 4 * 2 * 2 + HIDDEN * 4 * 5)
    vmem_cap = max(8, int((24 * 1024 * 1024) // max(per_row, 1)) // 8 * 8)
    cap = min(B // 2, 256, vmem_cap)
    bb = (cap // 8) * 8
    while bb >= 8:
        if B % bb == 0:
            return bb
        bb -= 8
    return B          # fallback: single chunk (block dim equals full array dim)


def lstm_speed_pred(traffic, params, b_block=None):
    """traffic: (B, 15, T, F) float32 (PyTorch layout).  Returns (B, 15, T)."""
    B, N, T, _ = traffic.shape
    assert N == N_SENSORS
    if b_block is None:
        b_block = _default_b_block(B, T)
    assert B % b_block == 0

    # glue: take the speed feature, time-major layout -> (T, B, 15)
    x_tbn = jnp.transpose(traffic[:, :, :, 0], (2, 0, 1)).astype(jnp.float32)

    rng = TRAFFIC_MAX - TRAFFIC_MIN

    # Toeplitz matrix C (15, 11) for the valid 5-tap conv over the sensor axis:
    # conv[:, j] = sum_h conv_w[h] * x[:, h + j]  ->  conv = x @ C
    rows = jnp.arange(N_SENSORS)[:, None]
    cols = jnp.arange(CONV_OUT)[None, :]
    diff = rows - cols
    conv_w = params["conv_w"]
    C = jnp.where((diff >= 0) & (diff < FILTER_H),
                  conv_w[jnp.clip(diff, 0, FILTER_H - 1)], 0.0)      # (15, 11)

    wih_t = params["w_ih"].T                                          # (11, 64)
    whh_t = params["w_hh"].T.astype(jnp.float32)                      # (16, 64)

    # Fold normalization (x - min)/range and the conv into the input weight:
    #   conv(x_norm) @ W_ih^T = x_raw @ W_in_eff + b_conv
    w_in_eff = ((C / rng) @ wih_t).astype(jnp.float32)                # (15, 64)
    b_conv = ((params["conv_b"][0] * jnp.ones((1, CONV_OUT), jnp.float32)
               - (TRAFFIC_MIN / rng) * jnp.ones((1, N_SENSORS), jnp.float32) @ C)
              @ wih_t)                                                # (1, 64)
    b_gates = ((params["b_ih"] + params["b_hh"]).reshape(1, 4 * HIDDEN)
               + b_conv).astype(jnp.float32)

    wout_t = params["w_out"].T.astype(jnp.float32)                    # (16, 15)
    b_out = params["b_out"].reshape(1, N_SENSORS).astype(jnp.float32)

    grid_spec = pltpu.PrefetchScalarGridSpec(
        num_scalar_prefetch=0,
        grid=(B // b_block,),                     # batch chunks (parallel)
        in_specs=[
            pl.BlockSpec((T, b_block, N_SENSORS), lambda b: (0, b, 0)),    # x
            pl.BlockSpec((N_SENSORS, 4 * HIDDEN), lambda b: (0, 0)),       # w_in
            pl.BlockSpec((HIDDEN, 4 * HIDDEN), lambda b: (0, 0)),          # whh
            pl.BlockSpec((1, 4 * HIDDEN), lambda b: (0, 0)),               # b_gate
            pl.BlockSpec((HIDDEN, N_SENSORS), lambda b: (0, 0)),           # w_out
            pl.BlockSpec((1, N_SENSORS), lambda b: (0, 0)),                # b_out
        ],
        out_specs=pl.BlockSpec((T, b_block, N_SENSORS), lambda b: (0, b, 0)),
        scratch_shapes=[pltpu.VMEM((T, b_block, HIDDEN), jnp.float32)] * 5,
    )

    out_tbn = pl.pallas_call(
        _lstm_speed_kernel,
        out_shape=jax.ShapeDtypeStruct((T, B, N_SENSORS), jnp.float32),
        grid_spec=grid_spec,
        compiler_params=pltpu.CompilerParams(
            dimension_semantics=("parallel",)),   # batch axis -> 2nd TC on v7x
    )(x_tbn, w_in_eff, whh_t, b_gates, wout_t, b_out)

    # PyTorch stacks per-step outputs at dim 2 -> (B, 15, T)
    return jnp.transpose(out_tbn, (1, 2, 0))


def _reference_forward(traffic, params):
    """Pure-JAX reference mirroring the PyTorch forward (use_history=False)."""
    x = (traffic[:, :, :, 0] - TRAFFIC_MIN) / (TRAFFIC_MAX - TRAFFIC_MIN)  # (B,15,T)
    B, _, T = x.shape
    h = jnp.zeros((B, HIDDEN), jnp.float32)
    c = jnp.zeros((B, HIDDEN), jnp.float32)
    outs = []
    for t in range(T):
        xt = x[:, :, t]
        conv = sum(params["conv_w"][k] * xt[:, k:k + CONV_OUT]
                   for k in range(FILTER_H)) + params["conv_b"][0]
        gates = (conv @ params["w_ih"].T + h @ params["w_hh"].T
                 + params["b_ih"] + params["b_hh"])
        i_g = jax.nn.sigmoid(gates[:, :HIDDEN])
        f_g = jax.nn.sigmoid(gates[:, HIDDEN:2 * HIDDEN])
        g_g = jnp.tanh(gates[:, 2 * HIDDEN:3 * HIDDEN])
        o_g = jax.nn.sigmoid(gates[:, 3 * HIDDEN:])
        c = f_g * c + i_g * g_g
        h = o_g * jnp.tanh(c)
        y = jax.nn.sigmoid(h @ params["w_out"].T + params["b_out"])
        outs.append(y * (TRAFFIC_MAX - TRAFFIC_MIN) + TRAFFIC_MIN)
    return jnp.stack(outs, 2)


def _init_params(key):
    ks = jax.random.split(key, 8)
    scale = 0.25
    return {
        # Conv2d(1,1,(5,1)) weight (1,1,5,1) flattened + scalar bias
        "conv_w": scale * jax.random.normal(ks[0], (FILTER_H,), jnp.float32),
        "conv_b": scale * jax.random.normal(ks[1], (1,), jnp.float32),
        # LSTMCell(11, 16)
        "w_ih": scale * jax.random.normal(ks[2], (4 * HIDDEN, CONV_OUT), jnp.float32),
        "w_hh": scale * jax.random.normal(ks[3], (4 * HIDDEN, HIDDEN), jnp.float32),
        "b_ih": scale * jax.random.normal(ks[4], (4 * HIDDEN,), jnp.float32),
        "b_hh": scale * jax.random.normal(ks[5], (4 * HIDDEN,), jnp.float32),
        # Linear(16, 15)
        "w_out": scale * jax.random.normal(ks[6], (N_SENSORS, HIDDEN), jnp.float32),
        "b_out": scale * jax.random.normal(ks[7], (N_SENSORS,), jnp.float32),
    }


if __name__ == "__main__":
    key = jax.random.PRNGKey(0)
    k_p, k_x = jax.random.split(key)
    params = _init_params(k_p)

    B, T = 16, 8     # B=16 -> 2 batch chunks of 8 (exercises the parallel grid axis)
    # traffic input (B, 15, T, 1): raw speeds in [TRAFFIC_MIN, TRAFFIC_MAX]
    traffic = jax.random.uniform(k_x, (B, N_SENSORS, T, 1), jnp.float32,
                                 minval=TRAFFIC_MIN, maxval=TRAFFIC_MAX)
    # TODO(synk): weather / history inputs of the PyTorch sample dict are unused
    #             with use_history=False / use_weather=False and are omitted.

    out = jax.block_until_ready(lstm_speed_pred(traffic, params))
    ref = _reference_forward(traffic, params)

    assert out.shape == (B, N_SENSORS, T), out.shape
    assert jnp.allclose(out, ref, rtol=1e-3, atol=1e-3), "mismatch vs reference"
    print("KERNEL_OK")
</pallas_src>

<mosaic_0001>
module attributes {stable_mosaic.version = 11 : i64} {
  func.func @_lstm_speed_kernel(%arg0: i32, %arg1: memref<8x8x15xf32, #tpu.memory_space<vmem>>, %arg2: memref<15x64xf32, #tpu.memory_space<vmem>>, %arg3: memref<16x64xf32, #tpu.memory_space<vmem>>, %arg4: memref<1x64xf32, #tpu.memory_space<vmem>>, %arg5: memref<16x15xf32, #tpu.memory_space<vmem>>, %arg6: memref<1x15xf32, #tpu.memory_space<vmem>>, %arg7: memref<8x8x15xf32, #tpu.memory_space<vmem>>, %arg8: memref<8x8x16xf32, #tpu.memory_space<vmem>>, %arg9: memref<8x8x16xf32, #tpu.memory_space<vmem>>, %arg10: memref<8x8x16xf32, #tpu.memory_space<vmem>>, %arg11: memref<8x8x16xf32, #tpu.memory_space<vmem>>, %arg12: memref<8x8x16xf32, #tpu.memory_space<vmem>>) attributes {dimension_semantics = [#tpu.dimension_semantics<parallel>], iteration_bounds = array<i64: 2>, scalar_prefetch = 0 : i64, scratch_operands = 5 : i64, tpu.core_type = #tpu.core_type<tc>, window_params = [{transform_indices = @transform_0, window_bounds = array<i64: 8, 8, 15>}, {pipeline_mode = #tpu.pipeline_mode<synchronous>, transform_indices = @transform_1, window_bounds = array<i64: 15, 64>}, {pipeline_mode = #tpu.pipeline_mode<synchronous>, transform_indices = @transform_2, window_bounds = array<i64: 16, 64>}, {pipeline_mode = #tpu.pipeline_mode<synchronous>, transform_indices = @transform_3, window_bounds = array<i64: 1, 64>}, {pipeline_mode = #tpu.pipeline_mode<synchronous>, transform_indices = @transform_4, window_bounds = array<i64: 16, 15>}, {pipeline_mode = #tpu.pipeline_mode<synchronous>, transform_indices = @transform_5, window_bounds = array<i64: 1, 15>}, {transform_indices = @transform_6, window_bounds = array<i64: 8, 8, 15>}]} {
    %c0 = arith.constant 0 : index
    %c0_0 = arith.constant 0 : index
    %c0_1 = arith.constant 0 : index
    %0 = vector.load %arg1[%c0, %c0_0, %c0_1] : memref<8x8x15xf32, #tpu.memory_space<vmem>>, vector<8x8x15xf32>
    %1 = vector.shape_cast %0 : vector<8x8x15xf32> to vector<64x15xf32>
    %c0_2 = arith.constant 0 : index
    %c0_3 = arith.constant 0 : index
    %2 = vector.load %arg2[%c0_2, %c0_3] : memref<15x64xf32, #tpu.memory_space<vmem>>, vector<15x64xf32>
    %cst = arith.constant dense<0.000000e+00> : vector<64x64xf32>
    %3 = tpu.matmul %1, %2, %cst {dimension_numbers = #tpu.dot_dimension_numbers<[1], [0], [0], [1], [0, 0, 1, 1], [], []>} : vector<64x15xf32>, vector<15x64xf32>, vector<64x64xf32> -> vector<64x64xf32>
    %c0_4 = arith.constant 0 : index
    %c0_5 = arith.constant 0 : index
    %4 = vector.load %arg4[%c0_4, %c0_5] : memref<1x64xf32, #tpu.memory_space<vmem>>, vector<1x64xf32>
    %5 = vector.broadcast %4 : vector<1x64xf32> to vector<64x64xf32>
    %6 = arith.addf %3, %5 : vector<64x64xf32>
    %7 = vector.extract_strided_slice %6 {offsets = [0, 0], sizes = [64, 16], strides = [1, 1]} : vector<64x64xf32> to vector<64x16xf32>
    %8 = vector.shape_cast %7 : vector<64x16xf32> to vector<8x8x16xf32>
    %c0_6 = arith.constant 0 : index
    %c0_7 = arith.constant 0 : index
    %c0_8 = arith.constant 0 : index
    %9 = vector.load %arg8[%c0_6, %c0_7, %c0_8] : memref<8x8x16xf32, #tpu.memory_space<vmem>>, vector<8x8x16xf32>
    tpu.vector_store %arg8[%c0_6, %c0_7, %c0_8], %8 {strides = array<i32>} : memref<8x8x16xf32, #tpu.memory_space<vmem>>, vector<8x8x16xf32>,
    %10 = vector.extract_strided_slice %6 {offsets = [0, 16], sizes = [64, 16], strides = [1, 1]} : vector<64x64xf32> to vector<64x16xf32>
    %11 = vector.shape_cast %10 : vector<64x16xf32> to vector<8x8x16xf32>
    %c0_9 = arith.constant 0 : index
    %c0_10 = arith.constant 0 : index
    %c0_11 = arith.constant 0 : index
    %12 = vector.load %arg9[%c0_9, %c0_10, %c0_11] : memref<8x8x16xf32, #tpu.memory_space<vmem>>, vector<8x8x16xf32>
    tpu.vector_store %arg9[%c0_9, %c0_10, %c0_11], %11 {strides = array<i32>} : memref<8x8x16xf32, #tpu.memory_space<vmem>>, vector<8x8x16xf32>,
    %13 = vector.extract_strided_slice %6 {offsets = [0, 32], sizes = [64, 16], strides = [1, 1]} : vector<64x64xf32> to vector<64x16xf32>
    %14 = vector.shape_cast %13 : vector<64x16xf32> to vector<8x8x16xf32>
    %c0_12 = arith.constant 0 : index
    %c0_13 = arith.constant 0 : index
    %c0_14 = arith.constant 0 : index
    %15 = vector.load %arg10[%c0_12, %c0_13, %c0_14] : memref<8x8x16xf32, #tpu.memory_space<vmem>>, vector<8x8x16xf32>
    tpu.vector_store %arg10[%c0_12, %c0_13, %c0_14], %14 {strides = array<i32>} : memref<8x8x16xf32, #tpu.memory_space<vmem>>, vector<8x8x16xf32>,
    %16 = vector.extract_strided_slice %6 {offsets = [0, 48], sizes = [64, 16], strides = [1, 1]} : vector<64x64xf32> to vector<64x16xf32>
    %17 = vector.shape_cast %16 : vector<64x16xf32> to vector<8x8x16xf32>
    %c0_15 = arith.constant 0 : index
    %c0_16 = arith.constant 0 : index
    %c0_17 = arith.constant 0 : index
    %18 = vector.load %arg11[%c0_15, %c0_16, %c0_17] : memref<8x8x16xf32, #tpu.memory_space<vmem>>, vector<8x8x16xf32>
    tpu.vector_store %arg11[%c0_15, %c0_16, %c0_17], %17 {strides = array<i32>} : memref<8x8x16xf32, #tpu.memory_space<vmem>>, vector<8x8x16xf32>,
    %c0_18 = arith.constant 0 : index
    %c0_19 = arith.constant 0 : index
    %19 = vector.load %arg3[%c0_18, %c0_19] : memref<16x64xf32, #tpu.memory_space<vmem>>, vector<16x64xf32>
    %20 = vector.extract_strided_slice %19 {offsets = [0, 0], sizes = [16, 16], strides = [1, 1]} : vector<16x64xf32> to vector<16x16xf32>
    %21 = vector.extract_strided_slice %19 {offsets = [0, 16], sizes = [16, 16], strides = [1, 1]} : vector<16x64xf32> to vector<16x16xf32>
    %22 = vector.extract_strided_slice %19 {offsets = [0, 32], sizes = [16, 16], strides = [1, 1]} : vector<16x64xf32> to vector<16x16xf32>
    %23 = vector.extract_strided_slice %19 {offsets = [0, 48], sizes = [16, 16], strides = [1, 1]} : vector<16x64xf32> to vector<16x16xf32>
    %cst_20 = arith.constant 0.000000e+00 : f32
    %24 = vector.broadcast %cst_20 : f32 to vector<8x16xf32>
    %cst_21 = arith.constant 0.000000e+00 : f32
    %25 = vector.broadcast %cst_21 : f32 to vector<8x16xf32>
    %c0_i32 = arith.constant 0 : i32
    %26 = arith.index_cast %c0_i32 : i32 to index
    %c0_22 = arith.constant 0 : index
    %c0_23 = arith.constant 0 : index
    %27 = vector.load %arg8[%26, %c0_22, %c0_23] : memref<8x8x16xf32, #tpu.memory_space<vmem>>, vector<1x8x16xf32>
    %28 = vector.shape_cast %27 : vector<1x8x16xf32> to vector<8x16xf32>
    %cst_24 = arith.constant dense<0.000000e+00> : vector<8x16xf32>
    %29 = tpu.matmul %24, %20, %cst_24 {dimension_numbers = #tpu.dot_dimension_numbers<[1], [0], [0], [1], [0, 0, 1, 1], [], []>} : vector<8x16xf32>, vector<16x16xf32>, vector<8x16xf32> -> vector<8x16xf32>
    %30 = arith.addf %28, %29 : vector<8x16xf32>
    %31 = arith.negf %30 : vector<8x16xf32>
    %32 = math.exp %31 : vector<8x16xf32>
    %cst_25 = arith.constant 1.000000e+00 : f32
    %33 = vector.broadcast %cst_25 : f32 to vector<8x16xf32>
    %34 = arith.addf %33, %32 : vector<8x16xf32>
    %35 = arith.divf %33, %34 : vector<8x16xf32>
    %36 = arith.index_cast %c0_i32 : i32 to index
    %c0_26 = arith.constant 0 : index
    %c0_27 = arith.constant 0 : index
    %37 = vector.load %arg9[%36, %c0_26, %c0_27] : memref<8x8x16xf32, #tpu.memory_space<vmem>>, vector<1x8x16xf32>
    %38 = vector.shape_cast %37 : vector<1x8x16xf32> to vector<8x16xf32>
    %cst_28 = arith.constant dense<0.000000e+00> : vector<8x16xf32>
    %39 = tpu.matmul %24, %21, %cst_28 {dimension_numbers = #tpu.dot_dimension_numbers<[1], [0], [0], [1], [0, 0, 1, 1], [], []>} : vector<8x16xf32>, vector<16x16xf32>, vector<8x16xf32> -> vector<8x16xf32>
    %40 = arith.addf %38, %39 : vector<8x16xf32>
    %41 = arith.negf %40 : vector<8x16xf32>
    %42 = math.exp %41 : vector<8x16xf32>
    %cst_29 = arith.constant 1.000000e+00 : f32
    %43 = vector.broadcast %cst_29 : f32 to vector<8x16xf32>
    %44 = arith.addf %43, %42 : vector<8x16xf32>
    %45 = arith.divf %43, %44 : vector<8x16xf32>
    %46 = arith.index_cast %c0_i32 : i32 to index
    %c0_30 = arith.constant 0 : index
    %c0_31 = arith.constant 0 : index
    %47 = vector.load %arg10[%46, %c0_30, %c0_31] : memref<8x8x16xf32, #tpu.memory_space<vmem>>, vector<1x8x16xf32>
    %48 = vector.shape_cast %47 : vector<1x8x16xf32> to vector<8x16xf32>
    %cst_32 = arith.constant dense<0.000000e+00> : vector<8x16xf32>
    %49 = tpu.matmul %24, %22, %cst_32 {dimension_numbers = #tpu.dot_dimension_numbers<[1], [0], [0], [1], [0, 0, 1, 1], [], []>} : vector<8x16xf32>, vector<16x16xf32>, vector<8x16xf32> -> vector<8x16xf32>
    %50 = arith.addf %48, %49 : vector<8x16xf32>
    %51 = math.tanh %50 : vector<8x16xf32>
    %52 = arith.index_cast %c0_i32 : i32 to index
    %c0_33 = arith.constant 0 : index
    %c0_34 = arith.constant 0 : index
    %53 = vector.load %arg11[%52, %c0_33, %c0_34] : memref<8x8x16xf32, #tpu.memory_space<vmem>>, vector<1x8x16xf32>
    %54 = vector.shape_cast %53 : vector<1x8x16xf32> to vector<8x16xf32>
    %cst_35 = arith.constant dense<0.000000e+00> : vector<8x16xf32>
    %55 = tpu.matmul %24, %23, %cst_35 {dimension_numbers = #tpu.dot_dimension_numbers<[1], [0], [0], [1], [0, 0, 1, 1], [], []>} : vector<8x16xf32>, vector<16x16xf32>, vector<8x16xf32> -> vector<8x16xf32>
    %56 = arith.addf %54, %55 : vector<8x16xf32>
    %57 = arith.negf %56 : vector<8x16xf32>
    %58 = math.exp %57 : vector<8x16xf32>
    %cst_36 = arith.constant 1.000000e+00 : f32
    %59 = vector.broadcast %cst_36 : f32 to vector<8x16xf32>
    %60 = arith.addf %59, %58 : vector<8x16xf32>
    %61 = arith.divf %59, %60 : vector<8x16xf32>
    %62 = arith.mulf %45, %25 : vector<8x16xf32>
    %63 = arith.mulf %35, %51 : vector<8x16xf32>
    %64 = arith.addf %62, %63 : vector<8x16xf32>
    %65 = math.tanh %64 : vector<8x16xf32>
    %66 = arith.mulf %61, %65 : vector<8x16xf32>
    %67 = arith.index_cast %c0_i32 : i32 to index
    %c0_37 = arith.constant 0 : index
    %c0_38 = arith.constant 0 : index
    %68 = vector.load %arg12[%67, %c0_37, %c0_38] : memref<8x8x16xf32, #tpu.memory_space<vmem>>, vector<1x8x16xf32>
    %69 = vector.shape_cast %68 : vector<1x8x16xf32> to vector<8x16xf32>
    %70 = vector.shape_cast %66 : vector<8x16xf32> to vector<1x8x16xf32>
    tpu.vector_store %arg12[%67, %c0_37, %c0_38], %70 {strides = array<i32>} : memref<8x8x16xf32, #tpu.memory_space<vmem>>, vector<1x8x16xf32>,
    %c1_i32 = arith.constant 1 : i32
    %71 = arith.index_cast %c1_i32 : i32 to index
    %c0_39 = arith.constant 0 : index
    %c0_40 = arith.constant 0 : index
    %72 = vector.load %arg8[%71, %c0_39, %c0_40] : memref<8x8x16xf32, #tpu.memory_space<vmem>>, vector<1x8x16xf32>
    %73 = vector.shape_cast %72 : vector<1x8x16xf32> to vector<8x16xf32>
    %cst_41 = arith.constant dense<0.000000e+00> : vector<8x16xf32>
    %74 = tpu.matmul %66, %20, %cst_41 {dimension_numbers = #tpu.dot_dimension_numbers<[1], [0], [0], [1], [0, 0, 1, 1], [], []>} : vector<8x16xf32>, vector<16x16xf32>, vector<8x16xf32> -> vector<8x16xf32>
    %75 = arith.addf %73, %74 : vector<8x16xf32>
    %76 = arith.negf %75 : vector<8x16xf32>
    %77 = math.exp %76 : vector<8x16xf32>
    %cst_42 = arith.constant 1.000000e+00 : f32
    %78 = vector.broadcast %cst_42 : f32 to vector<8x16xf32>
    %79 = arith.addf %78, %77 : vector<8x16xf32>
    %80 = arith.divf %78, %79 : vector<8x16xf32>
    %81 = arith.index_cast %c1_i32 : i32 to index
    %c0_43 = arith.constant 0 : index
    %c0_44 = arith.constant 0 : index
    %82 = vector.load %arg9[%81, %c0_43, %c0_44] : memref<8x8x16xf32, #tpu.memory_space<vmem>>, vector<1x8x16xf32>
    %83 = vector.shape_cast %82 : vector<1x8x16xf32> to vector<8x16xf32>
    %cst_45 = arith.constant dense<0.000000e+00> : vector<8x16xf32>
    %84 = tpu.matmul %66, %21, %cst_45 {dimension_numbers = #tpu.dot_dimension_numbers<[1], [0], [0], [1], [0, 0, 1, 1], [], []>} : vector<8x16xf32>, vector<16x16xf32>, vector<8x16xf32> -> vector<8x16xf32>
    %85 = arith.addf %83, %84 : vector<8x16xf32>
    %86 = arith.negf %85 : vector<8x16xf32>
    %87 = math.exp %86 : vector<8x16xf32>
    %cst_46 = arith.constant 1.000000e+00 : f32
    %88 = vector.broadcast %cst_46 : f32 to vector<8x16xf32>
    %89 = arith.addf %88, %87 : vector<8x16xf32>
    %90 = arith.divf %88, %89 : vector<8x16xf32>
    %91 = arith.index_cast %c1_i32 : i32 to index
    %c0_47 = arith.constant 0 : index
    %c0_48 = arith.constant 0 : index
    %92 = vector.load %arg10[%91, %c0_47, %c0_48] : memref<8x8x16xf32, #tpu.memory_space<vmem>>, vector<1x8x16xf32>
    %93 = vector.shape_cast %92 : vector<1x8x16xf32> to vector<8x16xf32>
    %cst_49 = arith.constant dense<0.000000e+00> : vector<8x16xf32>
    %94 = tpu.matmul %66, %22, %cst_49 {dimension_numbers = #tpu.dot_dimension_numbers<[1], [0], [0], [1], [0, 0, 1, 1], [], []>} : vector<8x16xf32>, vector<16x16xf32>, vector<8x16xf32> -> vector<8x16xf32>
    %95 = arith.addf %93, %94 : vector<8x16xf32>
    %96 = math.tanh %95 : vector<8x16xf32>
    %97 = arith.index_cast %c1_i32 : i32 to index
    %c0_50 = arith.constant 0 : index
    %c0_51 = arith.constant 0 : index
    %98 = vector.load %arg11[%97, %c0_50, %c0_51] : memref<8x8x16xf32, #tpu.memory_space<vmem>>, vector<1x8x16xf32>
    %99 = vector.shape_cast %98 : vector<1x8x16xf32> to vector<8x16xf32>
    %cst_52 = arith.constant dense<0.000000e+00> : vector<8x16xf32>
    %100 = tpu.matmul %66, %23, %cst_52 {dimension_numbers = #tpu.dot_dimension_numbers<[1], [0], [0], [1], [0, 0, 1, 1], [], []>} : vector<8x16xf32>, vector<16x16xf32>, vector<8x16xf32> -> vector<8x16xf32>
    %101 = arith.addf %99, %100 : vector<8x16xf32>
    %102 = arith.negf %101 : vector<8x16xf32>
    %103 = math.exp %102 : vector<8x16xf32>
    %cst_53 = arith.constant 1.000000e+00 : f32
    %104 = vector.broadcast %cst_53 : f32 to vector<8x16xf32>
    %105 = arith.addf %104, %103 : vector<8x16xf32>
    %106 = arith.divf %104, %105 : vector<8x16xf32>
    %107 = arith.mulf %90, %64 : vector<8x16xf32>
    %108 = arith.mulf %80, %96 : vector<8x16xf32>
    %109 = arith.addf %107, %108 : vector<8x16xf32>
    %110 = math.tanh %109 : vector<8x16xf32>
    %111 = arith.mulf %106, %110 : vector<8x16xf32>
    %112 = arith.index_cast %c1_i32 : i32 to index
    %c0_54 = arith.constant 0 : index
    %c0_55 = arith.constant 0 : index
    %113 = vector.load %arg12[%112, %c0_54, %c0_55] : memref<8x8x16xf32, #tpu.memory_space<vmem>>, vector<1x8x16xf32>
    %114 = vector.shape_cast %113 : vector<1x8x16xf32> to vector<8x16xf32>
    %115 = vector.shape_cast %111 : vector<8x16xf32> to vector<1x8x16xf32>
    tpu.vector_store %arg12[%112, %c0_54, %c0_55], %115 {strides = array<i32>} : memref<8x8x16xf32, #tpu.memory_space<vmem>>, vector<1x8x16xf32>,
    %c2_i32 = arith.constant 2 : i32
    %116 = arith.index_cast %c2_i32 : i32 to index
    %c0_56 = arith.constant 0 : index
    %c0_57 = arith.constant 0 : index
    %117 = vector.load %arg8[%116, %c0_56, %c0_57] : memref<8x8x16xf32, #tpu.memory_space<vmem>>, vector<1x8x16xf32>
    %118 = vector.shape_cast %117 : vector<1x8x16xf32> to vector<8x16xf32>
    %cst_58 = arith.constant dense<0.000000e+00> : vector<8x16xf32>
    %119 = tpu.matmul %111, %20, %cst_58 {dimension_numbers = #tpu.dot_dimension_numbers<[1], [0], [0], [1], [0, 0, 1, 1], [], []>} : vector<8x16xf32>, vector<16x16xf32>, vector<8x16xf32> -> vector<8x16xf32>
    %120 = arith.addf %118, %119 : vector<8x16xf32>
    %121 = arith.negf %120 : vector<8x16xf32>
    %122 = math.exp %121 : vector<8x16xf32>
    %cst_59 = arith.constant 1.000000e+00 : f32
    %123 = vector.broadcast %cst_59 : f32 to vector<8x16xf32>
    %124 = arith.addf %123, %122 : vector<8x16xf32>
    %125 = arith.divf %123, %124 : vector<8x16xf32>
    %126 = arith.index_cast %c2_i32 : i32 to index
    %c0_60 = arith.constant 0 : index
    %c0_61 = arith.constant 0 : index
    %127 = vector.load %arg9[%126, %c0_60, %c0_61] : memref<8x8x16xf32, #tpu.memory_space<vmem>>, vector<1x8x16xf32>
    %128 = vector.shape_cast %127 : vector<1x8x16xf32> to vector<8x16xf32>
    %cst_62 = arith.constant dense<0.000000e+00> : vector<8x16xf32>
    %129 = tpu.matmul %111, %21, %cst_62 {dimension_numbers = #tpu.dot_dimension_numbers<[1], [0], [0], [1], [0, 0, 1, 1], [], []>} : vector<8x16xf32>, vector<16x16xf32>, vector<8x16xf32> -> vector<8x16xf32>
    %130 = arith.addf %128, %129 : vector<8x16xf32>
    %131 = arith.negf %130 : vector<8x16xf32>
    %132 = math.exp %131 : vector<8x16xf32>
    %cst_63 = arith.constant 1.000000e+00 : f32
    %133 = vector.broadcast %cst_63 : f32 to vector<8x16xf32>
    %134 = arith.addf %133, %132 : vector<8x16xf32>
    %135 = arith.divf %133, %134 : vector<8x16xf32>
    %136 = arith.index_cast %c2_i32 : i32 to index
    %c0_64 = arith.constant 0 : index
    %c0_65 = arith.constant 0 : index
    %137 = vector.load %arg10[%136, %c0_64, %c0_65] : memref<8x8x16xf32, #tpu.memory_space<vmem>>, vector<1x8x16xf32>
    %138 = vector.shape_cast %137 : vector<1x8x16xf32> to vector<8x16xf32>
    %cst_66 = arith.constant dense<0.000000e+00> : vector<8x16xf32>
    %139 = tpu.matmul %111, %22, %cst_66 {dimension_numbers = #tpu.dot_dimension_numbers<[1], [0], [0], [1], [0, 0, 1, 1], [], []>} : vector<8x16xf32>, vector<16x16xf32>, vector<8x16xf32> -> vector<8x16xf32>
    %140 = arith.addf %138, %139 : vector<8x16xf32>
    %141 = math.tanh %140 : vector<8x16xf32>
    %142 = arith.index_cast %c2_i32 : i32 to index
    %c0_67 = arith.constant 0 : index
    %c0_68 = arith.constant 0 : index
    %143 = vector.load %arg11[%142, %c0_67, %c0_68] : memref<8x8x16xf32, #tpu.memory_space<vmem>>, vector<1x8x16xf32>
    %144 = vector.shape_cast %143 : vector<1x8x16xf32> to vector<8x16xf32>
    %cst_69 = arith.constant dense<0.000000e+00> : vector<8x16xf32>
    %145 = tpu.matmul %111, %23, %cst_69 {dimension_numbers = #tpu.dot_dimension_numbers<[1], [0], [0], [1], [0, 0, 1, 1], [], []>} : vector<8x16xf32>, vector<16x16xf32>, vector<8x16xf32> -> vector<8x16xf32>
    %146 = arith.addf %144, %145 : vector<8x16xf32>
    %147 = arith.negf %146 : vector<8x16xf32>
    %148 = math.exp %147 : vector<8x16xf32>
    %cst_70 = arith.constant 1.000000e+00 : f32
    %149 = vector.broadcast %cst_70 : f32 to vector<8x16xf32>
    %150 = arith.addf %149, %148 : vector<8x16xf32>
    %151 = arith.divf %149, %150 : vector<8x16xf32>
    %152 = arith.mulf %135, %109 : vector<8x16xf32>
    %153 = arith.mulf %125, %141 : vector<8x16xf32>
    %154 = arith.addf %152, %153 : vector<8x16xf32>
    %155 = math.tanh %154 : vector<8x16xf32>
    %156 = arith.mulf %151, %155 : vector<8x16xf32>
    %157 = arith.index_cast %c2_i32 : i32 to index
    %c0_71 = arith.constant 0 : index
    %c0_72 = arith.constant 0 : index
    %158 = vector.load %arg12[%157, %c0_71, %c0_72] : memref<8x8x16xf32, #tpu.memory_space<vmem>>, vector<1x8x16xf32>
    %159 = vector.shape_cast %158 : vector<1x8x16xf32> to vector<8x16xf32>
    %160 = vector.shape_cast %156 : vector<8x16xf32> to vector<1x8x16xf32>
    tpu.vector_store %arg12[%157, %c0_71, %c0_72], %160 {strides = array<i32>} : memref<8x8x16xf32, #tpu.memory_space<vmem>>, vector<1x8x16xf32>,
    %c3_i32 = arith.constant 3 : i32
    %161 = arith.index_cast %c3_i32 : i32 to index
    %c0_73 = arith.constant 0 : index
    %c0_74 = arith.constant 0 : index
    %162 = vector.load %arg8[%161, %c0_73, %c0_74] : memref<8x8x16xf32, #tpu.memory_space<vmem>>, vector<1x8x16xf32>
    %163 = vector.shape_cast %162 : vector<1x8x16xf32> to vector<8x16xf32>
    %cst_75 = arith.constant dense<0.000000e+00> : vector<8x16xf32>
    %164 = tpu.matmul %156, %20, %cst_75 {dimension_numbers = #tpu.dot_dimension_numbers<[1], [0], [0], [1], [0, 0, 1, 1], [], []>} : vector<8x16xf32>, vector<16x16xf32>, vector<8x16xf32> -> vector<8x16xf32>
    %165 = arith.addf %163, %164 : vector<8x16xf32>
    %166 = arith.negf %165 : vector<8x16xf32>
    %167 = math.exp %166 : vector<8x16xf32>
    %cst_76 = arith.constant 1.000000e+00 : f32
    %168 = vector.broadcast %cst_76 : f32 to vector<8x16xf32>
    %169 = arith.addf %168, %167 : vector<8x16xf32>
    %170 = arith.divf %168, %169 : vector<8x16xf32>
    %171 = arith.index_cast %c3_i32 : i32 to index
    %c0_77 = arith.constant 0 : index
    %c0_78 = arith.constant 0 : index
    %172 = vector.load %arg9[%171, %c0_77, %c0_78] : memref<8x8x16xf32, #tpu.memory_space<vmem>>, vector<1x8x16xf32>
    %173 = vector.shape_cast %172 : vector<1x8x16xf32> to vector<8x16xf32>
    %cst_79 = arith.constant dense<0.000000e+00> : vector<8x16xf32>
    %174 = tpu.matmul %156, %21, %cst_79 {dimension_numbers = #tpu.dot_dimension_numbers<[1], [0], [0], [1], [0, 0, 1, 1], [], []>} : vector<8x16xf32>, vector<16x16xf32>, vector<8x16xf32> -> vector<8x16xf32>
    %175 = arith.addf %173, %174 : vector<8x16xf32>
    %176 = arith.negf %175 : vector<8x16xf32>
    %177 = math.exp %176 : vector<8x16xf32>
    %cst_80 = arith.constant 1.000000e+00 : f32
    %178 = vector.broadcast %cst_80 : f32 to vector<8x16xf32>
    %179 = arith.addf %178, %177 : vector<8x16xf32>
    %180 = arith.divf %178, %179 : vector<8x16xf32>
    %181 = arith.index_cast %c3_i32 : i32 to index
    %c0_81 = arith.constant 0 : index
    %c0_82 = arith.constant 0 : index
    %182 = vector.load %arg10[%181, %c0_81, %c0_82] : memref<8x8x16xf32, #tpu.memory_space<vmem>>, vector<1x8x16xf32>
    %183 = vector.shape_cast %182 : vector<1x8x16xf32> to vector<8x16xf32>
    %cst_83 = arith.constant dense<0.000000e+00> : vector<8x16xf32>
    %184 = tpu.matmul %156, %22, %cst_83 {dimension_numbers = #tpu.dot_dimension_numbers<[1], [0], [0], [1], [0, 0, 1, 1], [], []>} : vector<8x16xf32>, vector<16x16xf32>, vector<8x16xf32> -> vector<8x16xf32>
    %185 = arith.addf %183, %184 : vector<8x16xf32>
    %186 = math.tanh %185 : vector<8x16xf32>
    %187 = arith.index_cast %c3_i32 : i32 to index
    %c0_84 = arith.constant 0 : index
    %c0_85 = arith.constant 0 : index
    %188 = vector.load %arg11[%187, %c0_84, %c0_85] : memref<8x8x16xf32, #tpu.memory_space<vmem>>, vector<1x8x16xf32>
    %189 = vector.shape_cast %188 : vector<1x8x16xf32> to vector<8x16xf32>
    %cst_86 = arith.constant dense<0.000000e+00> : vector<8x16xf32>
    %190 = tpu.matmul %156, %23, %cst_86 {dimension_numbers = #tpu.dot_dimension_numbers<[1], [0], [0], [1], [0, 0, 1, 1], [], []>} : vector<8x16xf32>, vector<16x16xf32>, vector<8x16xf32> -> vector<8x16xf32>
    %191 = arith.addf %189, %190 : vector<8x16xf32>
    %192 = arith.negf %191 : vector<8x16xf32>
    %193 = math.exp %192 : vector<8x16xf32>
    %cst_87 = arith.constant 1.000000e+00 : f32
    %194 = vector.broadcast %cst_87 : f32 to vector<8x16xf32>
    %195 = arith.addf %194, %193 : vector<8x16xf32>
    %196 = arith.divf %194, %195 : vector<8x16xf32>
    %197 = arith.mulf %180, %154 : vector<8x16xf32>
    %198 = arith.mulf %170, %186 : vector<8x16xf32>
    %199 = arith.addf %197, %198 : vector<8x16xf32>
    %200 = math.tanh %199 : vector<8x16xf32>
    %201 = arith.mulf %196, %200 : vector<8x16xf32>
    %202 = arith.index_cast %c3_i32 : i32 to index
    %c0_88 = arith.constant 0 : index
    %c0_89 = arith.constant 0 : index
    %203 = vector.load %arg12[%202, %c0_88, %c0_89] : memref<8x8x16xf32, #tpu.memory_space<vmem>>, vector<1x8x16xf32>
    %204 = vector.shape_cast %203 : vector<1x8x16xf32> to vector<8x16xf32>
    %205 = vector.shape_cast %201 : vector<8x16xf32> to vector<1x8x16xf32>
    tpu.vector_store %arg12[%202, %c0_88, %c0_89], %205 {strides = array<i32>} : memref<8x8x16xf32, #tpu.memory_space<vmem>>, vector<1x8x16xf32>,
    %c4_i32 = arith.constant 4 : i32
    %206 = arith.index_cast %c4_i32 : i32 to index
    %c0_90 = arith.constant 0 : index
    %c0_91 = arith.constant 0 : index
    %207 = vector.load %arg8[%206, %c0_90, %c0_91] : memref<8x8x16xf32, #tpu.memory_space<vmem>>, vector<1x8x16xf32>
    %208 = vector.shape_cast %207 : vector<1x8x16xf32> to vector<8x16xf32>
    %cst_92 = arith.constant dense<0.000000e+00> : vector<8x16xf32>
    %209 = tpu.matmul %201, %20, %cst_92 {dimension_numbers = #tpu.dot_dimension_numbers<[1], [0], [0], [1], [0, 0, 1, 1], [], []>} : vector<8x16xf32>, vector<16x16xf32>, vector<8x16xf32> -> vector<8x16xf32>
    %210 = arith.addf %208, %209 : vector<8x16xf32>
    %211 = arith.negf %210 : vector<8x16xf32>
    %212 = math.exp %211 : vector<8x16xf32>
    %cst_93 = arith.constant 1.000000e+00 : f32
    %213 = vector.broadcast %cst_93 : f32 to vector<8x16xf32>
    %214 = arith.addf %213, %212 : vector<8x16xf32>
    %215 = arith.divf %213, %214 : vector<8x16xf32>
    %216 = arith.index_cast %c4_i32 : i32 to index
    %c0_94 = arith.constant 0 : index
    %c0_95 = arith.constant 0 : index
    %217 = vector.load %arg9[%216, %c0_94, %c0_95] : memref<8x8x16xf32, #tpu.memory_space<vmem>>, vector<1x8x16xf32>
    %218 = vector.shape_cast %217 : vector<1x8x16xf32> to vector<8x16xf32>
    %cst_96 = arith.constant dense<0.000000e+00> : vector<8x16xf32>
    %219 = tpu.matmul %201, %21, %cst_96 {dimension_numbers = #tpu.dot_dimension_numbers<[1], [0], [0], [1], [0, 0, 1, 1], [], []>} : vector<8x16xf32>, vector<16x16xf32>, vector<8x16xf32> -> vector<8x16xf32>
    %220 = arith.addf %218, %219 : vector<8x16xf32>
    %221 = arith.negf %220 : vector<8x16xf32>
    %222 = math.exp %221 : vector<8x16xf32>
    %cst_97 = arith.constant 1.000000e+00 : f32
    %223 = vector.broadcast %cst_97 : f32 to vector<8x16xf32>
    %224 = arith.addf %223, %222 : vector<8x16xf32>
    %225 = arith.divf %223, %224 : vector<8x16xf32>
    %226 = arith.index_cast %c4_i32 : i32 to index
    %c0_98 = arith.constant 0 : index
    %c0_99 = arith.constant 0 : index
    %227 = vector.load %arg10[%226, %c0_98, %c0_99] : memref<8x8x16xf32, #tpu.memory_space<vmem>>, vector<1x8x16xf32>
    %228 = vector.shape_cast %227 : vector<1x8x16xf32> to vector<8x16xf32>
    %cst_100 = arith.constant dense<0.000000e+00> : vector<8x16xf32>
    %229 = tpu.matmul %201, %22, %cst_100 {dimension_numbers = #tpu.dot_dimension_numbers<[1], [0], [0], [1], [0, 0, 1, 1], [], []>} : vector<8x16xf32>, vector<16x16xf32>, vector<8x16xf32> -> vector<8x16xf32>
    %230 = arith.addf %228, %229 : vector<8x16xf32>
    %231 = math.tanh %230 : vector<8x16xf32>
    %232 = arith.index_cast %c4_i32 : i32 to index
    %c0_101 = arith.constant 0 : index
    %c0_102 = arith.constant 0 : index
    %233 = vector.load %arg11[%232, %c0_101, %c0_102] : memref<8x8x16xf32, #tpu.memory_space<vmem>>, vector<1x8x16xf32>
    %234 = vector.shape_cast %233 : vector<1x8x16xf32> to vector<8x16xf32>
    %cst_103 = arith.constant dense<0.000000e+00> : vector<8x16xf32>
    %235 = tpu.matmul %201, %23, %cst_103 {dimension_numbers = #tpu.dot_dimension_numbers<[1], [0], [0], [1], [0, 0, 1, 1], [], []>} : vector<8x16xf32>, vector<16x16xf32>, vector<8x16xf32> -> vector<8x16xf32>
    %236 = arith.addf %234, %235 : vector<8x16xf32>
    %237 = arith.negf %236 : vector<8x16xf32>
    %238 = math.exp %237 : vector<8x16xf32>
    %cst_104 = arith.constant 1.000000e+00 : f32
    %239 = vector.broadcast %cst_104 : f32 to vector<8x16xf32>
    %240 = arith.addf %239, %238 : vector<8x16xf32>
    %241 = arith.divf %239, %240 : vector<8x16xf32>
    %242 = arith.mulf %225, %199 : vector<8x16xf32>
    %243 = arith.mulf %215, %231 : vector<8x16xf32>
    %244 = arith.addf %242, %243 : vector<8x16xf32>
    %245 = math.tanh %244 : vector<8x16xf32>
    %246 = arith.mulf %241, %245 : vector<8x16xf32>
    %247 = arith.index_cast %c4_i32 : i32 to index
    %c0_105 = arith.constant 0 : index
    %c0_106 = arith.constant 0 : index
    %248 = vector.load %arg12[%247, %c0_105, %c0_106] : memref<8x8x16xf32, #tpu.memory_space<vmem>>, vector<1x8x16xf32>
    %249 = vector.shape_cast %248 : vector<1x8x16xf32> to vector<8x16xf32>
    %250 = vector.shape_cast %246 : vector<8x16xf32> to vector<1x8x16xf32>
    tpu.vector_store %arg12[%247, %c0_105, %c0_106], %250 {strides = array<i32>} : memref<8x8x16xf32, #tpu.memory_space<vmem>>, vector<1x8x16xf32>,
    %c5_i32 = arith.constant 5 : i32
    %251 = arith.index_cast %c5_i32 : i32 to index
    %c0_107 = arith.constant 0 : index
    %c0_108 = arith.constant 0 : index
    %252 = vector.load %arg8[%251, %c0_107, %c0_108] : memref<8x8x16xf32, #tpu.memory_space<vmem>>, vector<1x8x16xf32>
    %253 = vector.shape_cast %252 : vector<1x8x16xf32> to vector<8x16xf32>
    %cst_109 = arith.constant dense<0.000000e+00> : vector<8x16xf32>
    %254 = tpu.matmul %246, %20, %cst_109 {dimension_numbers = #tpu.dot_dimension_numbers<[1], [0], [0], [1], [0, 0, 1, 1], [], []>} : vector<8x16xf32>, vector<16x16xf32>, vector<8x16xf32> -> vector<8x16xf32>
    %255 = arith.addf %253, %254 : vector<8x16xf32>
    %256 = arith.negf %255 : vector<8x16xf32>
    %257 = math.exp %256 : vector<8x16xf32>
    %cst_110 = arith.constant 1.000000e+00 : f32
    %258 = vector.broadcast %cst_110 : f32 to vector<8x16xf32>
    %259 = arith.addf %258, %257 : vector<8x16xf32>
    %260 = arith.divf %258, %259 : vector<8x16xf32>
    %261 = arith.index_cast %c5_i32 : i32 to index
    %c0_111 = arith.constant 0 : index
    %c0_112 = arith.constant 0 : index
    %262 = vector.load %arg9[%261, %c0_111, %c0_112] : memref<8x8x16xf32, #tpu.memory_space<vmem>>, vector<1x8x16xf32>
    %263 = vector.shape_cast %262 : vector<1x8x16xf32> to vector<8x16xf32>
    %cst_113 = arith.constant dense<0.000000e+00> : vector<8x16xf32>
    %264 = tpu.matmul %246, %21, %cst_113 {dimension_numbers = #tpu.dot_dimension_numbers<[1], [0], [0], [1], [0, 0, 1, 1], [], []>} : vector<8x16xf32>, vector<16x16xf32>, vector<8x16xf32> -> vector<8x16xf32>
    %265 = arith.addf %263, %264 : vector<8x16xf32>
    %266 = arith.negf %265 : vector<8x16xf32>
    %267 = math.exp %266 : vector<8x16xf32>
    %cst_114 = arith.constant 1.000000e+00 : f32
    %268 = vector.broadcast %cst_114 : f32 to vector<8x16xf32>
    %269 = arith.addf %268, %267 : vector<8x16xf32>
    %270 = arith.divf %268, %269 : vector<8x16xf32>
    %271 = arith.index_cast %c5_i32 : i32 to index
    %c0_115 = arith.constant 0 : index
    %c0_116 = arith.constant 0 : index
    %272 = vector.load %arg10[%271, %c0_115, %c0_116] : memref<8x8x16xf32, #tpu.memory_space<vmem>>, vector<1x8x16xf32>
    %273 = vector.shape_cast %272 : vector<1x8x16xf32> to vector<8x16xf32>
    %cst_117 = arith.constant dense<0.000000e+00> : vector<8x16xf32>
    %274 = tpu.matmul %246, %22, %cst_117 {dimension_numbers = #tpu.dot_dimension_numbers<[1], [0], [0], [1], [0, 0, 1, 1], [], []>} : vector<8x16xf32>, vector<16x16xf32>, vector<8x16xf32> -> vector<8x16xf32>
    %275 = arith.addf %273, %274 : vector<8x16xf32>
    %276 = math.tanh %275 : vector<8x16xf32>
    %277 = arith.index_cast %c5_i32 : i32 to index
    %c0_118 = arith.constant 0 : index
    %c0_119 = arith.constant 0 : index
    %278 = vector.load %arg11[%277, %c0_118, %c0_119] : memref<8x8x16xf32, #tpu.memory_space<vmem>>, vector<1x8x16xf32>
    %279 = vector.shape_cast %278 : vector<1x8x16xf32> to vector<8x16xf32>
    %cst_120 = arith.constant dense<0.000000e+00> : vector<8x16xf32>
    %280 = tpu.matmul %246, %23, %cst_120 {dimension_numbers = #tpu.dot_dimension_numbers<[1], [0], [0], [1], [0, 0, 1, 1], [], []>} : vector<8x16xf32>, vector<16x16xf32>, vector<8x16xf32> -> vector<8x16xf32>
    %281 = arith.addf %279, %280 : vector<8x16xf32>
    %282 = arith.negf %281 : vector<8x16xf32>
    %283 = math.exp %282 : vector<8x16xf32>
    %cst_121 = arith.constant 1.000000e+00 : f32
    %284 = vector.broadcast %cst_121 : f32 to vector<8x16xf32>
    %285 = arith.addf %284, %283 : vector<8x16xf32>
    %286 = arith.divf %284, %285 : vector<8x16xf32>
    %287 = arith.mulf %270, %244 : vector<8x16xf32>
    %288 = arith.mulf %260, %276 : vector<8x16xf32>
    %289 = arith.addf %287, %288 : vector<8x16xf32>
    %290 = math.tanh %289 : vector<8x16xf32>
    %291 = arith.mulf %286, %290 : vector<8x16xf32>
    %292 = arith.index_cast %c5_i32 : i32 to index
    %c0_122 = arith.constant 0 : index
    %c0_123 = arith.constant 0 : index
    %293 = vector.load %arg12[%292, %c0_122, %c0_123] : memref<8x8x16xf32, #tpu.memory_space<vmem>>, vector<1x8x16xf32>
    %294 = vector.shape_cast %293 : vector<1x8x16xf32> to vector<8x16xf32>
    %295 = vector.shape_cast %291 : vector<8x16xf32> to vector<1x8x16xf32>
    tpu.vector_store %arg12[%292, %c0_122, %c0_123], %295 {strides = array<i32>} : memref<8x8x16xf32, #tpu.memory_space<vmem>>, vector<1x8x16xf32>,
    %c6_i32 = arith.constant 6 : i32
    %296 = arith.index_cast %c6_i32 : i32 to index
    %c0_124 = arith.constant 0 : index
    %c0_125 = arith.constant 0 : index
    %297 = vector.load %arg8[%296, %c0_124, %c0_125] : memref<8x8x16xf32, #tpu.memory_space<vmem>>, vector<1x8x16xf32>
    %298 = vector.shape_cast %297 : vector<1x8x16xf32> to vector<8x16xf32>
    %cst_126 = arith.constant dense<0.000000e+00> : vector<8x16xf32>
    %299 = tpu.matmul %291, %20, %cst_126 {dimension_numbers = #tpu.dot_dimension_numbers<[1], [0], [0], [1], [0, 0, 1, 1], [], []>} : vector<8x16xf32>, vector<16x16xf32>, vector<8x16xf32> -> vector<8x16xf32>
    %300 = arith.addf %298, %299 : vector<8x16xf32>
    %301 = arith.negf %300 : vector<8x16xf32>
    %302 = math.exp %301 : vector<8x16xf32>
    %cst_127 = arith.constant 1.000000e+00 : f32
    %303 = vector.broadcast %cst_127 : f32 to vector<8x16xf32>
    %304 = arith.addf %303, %302 : vector<8x16xf32>
    %305 = arith.divf %303, %304 : vector<8x16xf32>
    %306 = arith.index_cast %c6_i32 : i32 to index
    %c0_128 = arith.constant 0 : index
    %c0_129 = arith.constant 0 : index
    %307 = vector.load %arg9[%306, %c0_128, %c0_129] : memref<8x8x16xf32, #tpu.memory_space<vmem>>, vector<1x8x16xf32>
    %308 = vector.shape_cast %307 : vector<1x8x16xf32> to vector<8x16xf32>
    %cst_130 = arith.constant dense<0.000000e+00> : vector<8x16xf32>
    %309 = tpu.matmul %291, %21, %cst_130 {dimension_numbers = #tpu.dot_dimension_numbers<[1], [0], [0], [1], [0, 0, 1, 1], [], []>} : vector<8x16xf32>, vector<16x16xf32>, vector<8x16xf32> -> vector<8x16xf32>
    %310 = arith.addf %308, %309 : vector<8x16xf32>
    %311 = arith.negf %310 : vector<8x16xf32>
    %312 = math.exp %311 : vector<8x16xf32>
    %cst_131 = arith.constant 1.000000e+00 : f32
    %313 = vector.broadcast %cst_131 : f32 to vector<8x16xf32>
    %314 = arith.addf %313, %312 : vector<8x16xf32>
    %315 = arith.divf %313, %314 : vector<8x16xf32>
    %316 = arith.index_cast %c6_i32 : i32 to index
    %c0_132 = arith.constant 0 : index
    %c0_133 = arith.constant 0 : index
    %317 = vector.load %arg10[%316, %c0_132, %c0_133] : memref<8x8x16xf32, #tpu.memory_space<vmem>>, vector<1x8x16xf32>
    %318 = vector.shape_cast %317 : vector<1x8x16xf32> to vector<8x16xf32>
    %cst_134 = arith.constant dense<0.000000e+00> : vector<8x16xf32>
    %319 = tpu.matmul %291, %22, %cst_134 {dimension_numbers = #tpu.dot_dimension_numbers<[1], [0], [0], [1], [0, 0, 1, 1], [], []>} : vector<8x16xf32>, vector<16x16xf32>, vector<8x16xf32> -> vector<8x16xf32>
    %320 = arith.addf %318, %319 : vector<8x16xf32>
    %321 = math.tanh %320 : vector<8x16xf32>
    %322 = arith.index_cast %c6_i32 : i32 to index
    %c0_135 = arith.constant 0 : index
    %c0_136 = arith.constant 0 : index
    %323 = vector.load %arg11[%322, %c0_135, %c0_136] : memref<8x8x16xf32, #tpu.memory_space<vmem>>, vector<1x8x16xf32>
    %324 = vector.shape_cast %323 : vector<1x8x16xf32> to vector<8x16xf32>
    %cst_137 = arith.constant dense<0.000000e+00> : vector<8x16xf32>
    %325 = tpu.matmul %291, %23, %cst_137 {dimension_numbers = #tpu.dot_dimension_numbers<[1], [0], [0], [1], [0, 0, 1, 1], [], []>} : vector<8x16xf32>, vector<16x16xf32>, vector<8x16xf32> -> vector<8x16xf32>
    %326 = arith.addf %324, %325 : vector<8x16xf32>
    %327 = arith.negf %326 : vector<8x16xf32>
    %328 = math.exp %327 : vector<8x16xf32>
    %cst_138 = arith.constant 1.000000e+00 : f32
    %329 = vector.broadcast %cst_138 : f32 to vector<8x16xf32>
    %330 = arith.addf %329, %328 : vector<8x16xf32>
    %331 = arith.divf %329, %330 : vector<8x16xf32>
    %332 = arith.mulf %315, %289 : vector<8x16xf32>
    %333 = arith.mulf %305, %321 : vector<8x16xf32>
    %334 = arith.addf %332, %333 : vector<8x16xf32>
    %335 = math.tanh %334 : vector<8x16xf32>
    %336 = arith.mulf %331, %335 : vector<8x16xf32>
    %337 = arith.index_cast %c6_i32 : i32 to index
    %c0_139 = arith.constant 0 : index
    %c0_140 = arith.constant 0 : index
    %338 = vector.load %arg12[%337, %c0_139, %c0_140] : memref<8x8x16xf32, #tpu.memory_space<vmem>>, vector<1x8x16xf32>
    %339 = vector.shape_cast %338 : vector<1x8x16xf32> to vector<8x16xf32>
    %340 = vector.shape_cast %336 : vector<8x16xf32> to vector<1x8x16xf32>
    tpu.vector_store %arg12[%337, %c0_139, %c0_140], %340 {strides = array<i32>} : memref<8x8x16xf32, #tpu.memory_space<vmem>>, vector<1x8x16xf32>,
    %c7_i32 = arith.constant 7 : i32
    %341 = arith.index_cast %c7_i32 : i32 to index
    %c0_141 = arith.constant 0 : index
    %c0_142 = arith.constant 0 : index
    %342 = vector.load %arg8[%341, %c0_141, %c0_142] : memref<8x8x16xf32, #tpu.memory_space<vmem>>, vector<1x8x16xf32>
    %343 = vector.shape_cast %342 : vector<1x8x16xf32> to vector<8x16xf32>
    %cst_143 = arith.constant dense<0.000000e+00> : vector<8x16xf32>
    %344 = tpu.matmul %336, %20, %cst_143 {dimension_numbers = #tpu.dot_dimension_numbers<[1], [0], [0], [1], [0, 0, 1, 1], [], []>} : vector<8x16xf32>, vector<16x16xf32>, vector<8x16xf32> -> vector<8x16xf32>
    %345 = arith.addf %343, %344 : vector<8x16xf32>
    %346 = arith.negf %345 : vector<8x16xf32>
    %347 = math.exp %346 : vector<8x16xf32>
    %cst_144 = arith.constant 1.000000e+00 : f32
    %348 = vector.broadcast %cst_144 : f32 to vector<8x16xf32>
    %349 = arith.addf %348, %347 : vector<8x16xf32>
    %350 = arith.divf %348, %349 : vector<8x16xf32>
    %351 = arith.index_cast %c7_i32 : i32 to index
    %c0_145 = arith.constant 0 : index
    %c0_146 = arith.constant 0 : index
    %352 = vector.load %arg9[%351, %c0_145, %c0_146] : memref<8x8x16xf32, #tpu.memory_space<vmem>>, vector<1x8x16xf32>
    %353 = vector.shape_cast %352 : vector<1x8x16xf32> to vector<8x16xf32>
    %cst_147 = arith.constant dense<0.000000e+00> : vector<8x16xf32>
    %354 = tpu.matmul %336, %21, %cst_147 {dimension_numbers = #tpu.dot_dimension_numbers<[1], [0], [0], [1], [0, 0, 1, 1], [], []>} : vector<8x16xf32>, vector<16x16xf32>, vector<8x16xf32> -> vector<8x16xf32>
    %355 = arith.addf %353, %354 : vector<8x16xf32>
    %356 = arith.negf %355 : vector<8x16xf32>
    %357 = math.exp %356 : vector<8x16xf32>
    %cst_148 = arith.constant 1.000000e+00 : f32
    %358 = vector.broadcast %cst_148 : f32 to vector<8x16xf32>
    %359 = arith.addf %358, %357 : vector<8x16xf32>
    %360 = arith.divf %358, %359 : vector<8x16xf32>
    %361 = arith.index_cast %c7_i32 : i32 to index
    %c0_149 = arith.constant 0 : index
    %c0_150 = arith.constant 0 : index
    %362 = vector.load %arg10[%361, %c0_149, %c0_150] : memref<8x8x16xf32, #tpu.memory_space<vmem>>, vector<1x8x16xf32>
    %363 = vector.shape_cast %362 : vector<1x8x16xf32> to vector<8x16xf32>
    %cst_151 = arith.constant dense<0.000000e+00> : vector<8x16xf32>
    %364 = tpu.matmul %336, %22, %cst_151 {dimension_numbers = #tpu.dot_dimension_numbers<[1], [0], [0], [1], [0, 0, 1, 1], [], []>} : vector<8x16xf32>, vector<16x16xf32>, vector<8x16xf32> -> vector<8x16xf32>
    %365 = arith.addf %363, %364 : vector<8x16xf32>
    %366 = math.tanh %365 : vector<8x16xf32>
    %367 = arith.index_cast %c7_i32 : i32 to index
    %c0_152 = arith.constant 0 : index
    %c0_153 = arith.constant 0 : index
    %368 = vector.load %arg11[%367, %c0_152, %c0_153] : memref<8x8x16xf32, #tpu.memory_space<vmem>>, vector<1x8x16xf32>
    %369 = vector.shape_cast %368 : vector<1x8x16xf32> to vector<8x16xf32>
    %cst_154 = arith.constant dense<0.000000e+00> : vector<8x16xf32>
    %370 = tpu.matmul %336, %23, %cst_154 {dimension_numbers = #tpu.dot_dimension_numbers<[1], [0], [0], [1], [0, 0, 1, 1], [], []>} : vector<8x16xf32>, vector<16x16xf32>, vector<8x16xf32> -> vector<8x16xf32>
    %371 = arith.addf %369, %370 : vector<8x16xf32>
    %372 = arith.negf %371 : vector<8x16xf32>
    %373 = math.exp %372 : vector<8x16xf32>
    %cst_155 = arith.constant 1.000000e+00 : f32
    %374 = vector.broadcast %cst_155 : f32 to vector<8x16xf32>
    %375 = arith.addf %374, %373 : vector<8x16xf32>
    %376 = arith.divf %374, %375 : vector<8x16xf32>
    %377 = arith.mulf %360, %334 : vector<8x16xf32>
    %378 = arith.mulf %350, %366 : vector<8x16xf32>
    %379 = arith.addf %377, %378 : vector<8x16xf32>
    %380 = math.tanh %379 : vector<8x16xf32>
    %381 = arith.mulf %376, %380 : vector<8x16xf32>
    %382 = arith.index_cast %c7_i32 : i32 to index
    %c0_156 = arith.constant 0 : index
    %c0_157 = arith.constant 0 : index
    %383 = vector.load %arg12[%382, %c0_156, %c0_157] : memref<8x8x16xf32, #tpu.memory_space<vmem>>, vector<1x8x16xf32>
    %384 = vector.shape_cast %383 : vector<1x8x16xf32> to vector<8x16xf32>
    %385 = vector.shape_cast %381 : vector<8x16xf32> to vector<1x8x16xf32>
    tpu.vector_store %arg12[%382, %c0_156, %c0_157], %385 {strides = array<i32>} : memref<8x8x16xf32, #tpu.memory_space<vmem>>, vector<1x8x16xf32>,
    %c8_i32 = arith.constant 8 : i32
    %c0_158 = arith.constant 0 : index
    %c0_159 = arith.constant 0 : index
    %c0_160 = arith.constant 0 : index
    %386 = vector.load %arg12[%c0_158, %c0_159, %c0_160] : memref<8x8x16xf32, #tpu.memory_space<vmem>>, vector<8x8x16xf32>
    %387 = vector.shape_cast %386 : vector<8x8x16xf32> to vector<64x16xf32>
    %c0_161 = arith.constant 0 : index
    %c0_162 = arith.constant 0 : index
    %388 = vector.load %arg5[%c0_161, %c0_162] : memref<16x15xf32, #tpu.memory_space<vmem>>, vector<16x15xf32>
    %cst_163 = arith.constant dense<0.000000e+00> : vector<64x15xf32>
    %389 = tpu.matmul %387, %388, %cst_163 {dimension_numbers = #tpu.dot_dimension_numbers<[1], [0], [0], [1], [0, 0, 1, 1], [], []>} : vector<64x16xf32>, vector<16x15xf32>, vector<64x15xf32> -> vector<64x15xf32>
    %c0_164 = arith.constant 0 : index
    %c0_165 = arith.constant 0 : index
    %390 = vector.load %arg6[%c0_164, %c0_165] : memref<1x15xf32, #tpu.memory_space<vmem>>, vector<1x15xf32>
    %391 = vector.broadcast %390 : vector<1x15xf32> to vector<64x15xf32>
    %392 = arith.addf %389, %391 : vector<64x15xf32>
    %393 = arith.negf %392 : vector<64x15xf32>
    %394 = math.exp %393 : vector<64x15xf32>
    %cst_166 = arith.constant 1.000000e+00 : f32
    %395 = vector.broadcast %cst_166 : f32 to vector<64x15xf32>
    %396 = arith.addf %395, %394 : vector<64x15xf32>
    %397 = arith.divf %395, %396 : vector<64x15xf32>
    %cst_167 = arith.constant 8.000000e+01 : f32
    %398 = vector.broadcast %cst_167 : f32 to vector<64x15xf32>
    %399 = arith.mulf %397, %398 : vector<64x15xf32>
    %cst_168 = arith.constant 0.000000e+00 : f32
    %400 = vector.broadcast %cst_168 : f32 to vector<64x15xf32>
    %401 = arith.addf %399, %400 : vector<64x15xf32>
    %402 = vector.shape_cast %401 : vector<64x15xf32> to vector<8x8x15xf32>
    %c0_169 = arith.constant 0 : index
    %c0_170 = arith.constant 0 : index
    %c0_171 = arith.constant 0 : index
    %403 = vector.load %arg7[%c0_169, %c0_170, %c0_171] : memref<8x8x15xf32, #tpu.memory_space<vmem>>, vector<8x8x15xf32>
    tpu.vector_store %arg7[%c0_169, %c0_170, %c0_171], %402 {strides = array<i32>} : memref<8x8x15xf32, #tpu.memory_space<vmem>>, vector<8x8x15xf32>,
    return
  }
  func.func @transform_0(%arg0: i32) -> (i32, i32, i32) {
    %c0_i32 = arith.constant 0 : i32
    %c0_i32_0 = arith.constant 0 : i32
    %c0_i32_1 = arith.constant 0 : i32
    return %c0_i32, %arg0, %c0_i32_0 : i32, i32, i32
  }
  func.func @transform_1(%arg0: i32) -> (i32, i32) {
    %c0_i32 = arith.constant 0 : i32
    %c0_i32_0 = arith.constant 0 : i32
    %c0_i32_1 = arith.constant 0 : i32
    return %c0_i32, %c0_i32_0 : i32, i32
  }
  func.func @transform_2(%arg0: i32) -> (i32, i32) {
    %c0_i32 = arith.constant 0 : i32
    %c0_i32_0 = arith.constant 0 : i32
    %c0_i32_1 = arith.constant 0 : i32
    return %c0_i32, %c0_i32_0 : i32, i32
  }
  func.func @transform_3(%arg0: i32) -> (i32, i32) {
    %c0_i32 = arith.constant 0 : i32
    %c0_i32_0 = arith.constant 0 : i32
    %c0_i32_1 = arith.constant 0 : i32
    return %c0_i32, %c0_i32_0 : i32, i32
  }
  func.func @transform_4(%arg0: i32) -> (i32, i32) {
    %c0_i32 = arith.constant 0 : i32
    %c0_i32_0 = arith.constant 0 : i32
    %c0_i32_1 = arith.constant 0 : i32
    return %c0_i32, %c0_i32_0 : i32, i32
  }
  func.func @transform_5(%arg0: i32) -> (i32, i32) {
    %c0_i32 = arith.constant 0 : i32
    %c0_i32_0 = arith.constant 0 : i32
    %c0_i32_1 = arith.constant 0 : i32
    return %c0_i32, %c0_i32_0 : i32, i32
  }
  func.func @transform_6(%arg0: i32) -> (i32, i32, i32) {
    %c0_i32 = arith.constant 0 : i32
    %c0_i32_0 = arith.constant 0 : i32
    %c0_i32_1 = arith.constant 0 : i32
    return %c0_i32, %arg0, %c0_i32_0 : i32, i32, i32
  }
}

</mosaic_0001>

<llo_original>
// kernel: tpu_custom_call.1
$region0: #{tpu_custom_call.1}
  #allocation0 [shape = 'u32[]', space=smem, size = 0x4, offset = 0x4, fixed_abs, tag = 'smem constant byte address 0x4 - core index']
  #allocation1 [shape = 'u32[72,128]{1,0:T(1,128)}', space=vmem, size = 0x9000, scoped, tag = 'internal scratch']
  #allocation2 [shape = 'f32[8,8,16]{2,1,0:T(8,128)}', space=vmem, size = 0x8000, scoped, tag = 'scratch operand']
  #allocation3 [shape = 'f32[8,8,16]{2,1,0:T(8,128)}', space=vmem, size = 0x8000, scoped, tag = 'scratch operand']
  #allocation4 [shape = 'f32[8,8,16]{2,1,0:T(8,128)}', space=vmem, size = 0x8000, scoped, tag = 'scratch operand']
  #allocation5 [shape = 'f32[8,8,16]{2,1,0:T(8,128)}', space=vmem, size = 0x8000, scoped, tag = 'scratch operand']
  #allocation6 [shape = 'f32[8,8,16]{2,1,0:T(8,128)}', space=vmem, size = 0x8000, scoped, tag = 'scratch operand']
  %s0 = inlined_call_operand.vmem [shape: f32[8,16,15], index: 0, kind: input, shape index: {}]
  %s1 = inlined_call_operand.vmem [shape: f32[15,64], index: 1, kind: input, shape index: {}]
  %s2 = inlined_call_operand.vmem [shape: f32[16,64], index: 2, kind: input, shape index: {}]
  %s3 = inlined_call_operand.vmem [shape: f32[1,64], index: 3, kind: input, shape index: {}]
  %s4 = inlined_call_operand.vmem [shape: f32[16,15], index: 4, kind: input, shape index: {}]
  %s5 = inlined_call_operand.vmem [shape: f32[1,15], index: 5, kind: input, shape index: {}]
  %s6 = inlined_call_operand.vmem [shape: f32[8,16,15], index: 6, kind: output, shape index: {}]
  %s7 = sld [smem:[#allocation0]]
  $region129: #{tpu_custom_call.1} parent=0
    _
  %s9 = ssub.s32 1, %s7
  %s10 = scalar_select 0, %s9, %s7
  $region1: #{tpu_custom_call.1} parent=0
    #allocation7 [shape = 'u8[65536]{0}', space=vmem, size = 0x10000, scoped, tag = 'input window, operand 0']
    #allocation8 [shape = 'u8[65536]{0}', space=vmem, size = 0x10000, scoped, tag = 'output window, operand 0']
    loop: start=0, step=1, limit=4
    $region2: #{tpu_custom_call.1} parent=1 // loop_pre_header
      _
    $region3: #{tpu_custom_call.1} parent=1 // loop_header
      %s12 = sphi 0, %s16
      %p13 = scmp.ge.s32.totalorder %s12, 4
      %s22 = sphi 0, %s24
      %s25 = sphi 0, %s22
      %s26 = sphi 0, %s25
      %s42 = sphi 0, %s26
      %s46 = sphi 0, %s46
      %s48 = sphi 0, %s46
      %s49 = sphi 0, %s48
      %s63 = sphi 0, %s49
      %s67 = sphi 0, %s67
      %s69 = sphi 0, %s67
      %s70 = sphi 0, %s69
      %s84 = sphi 0, %s70
      %s88 = sphi 0, %s88
      %s90 = sphi 0, %s88
      %s91 = sphi 0, %s90
      %s105 = sphi 0, %s91
      %s109 = sphi 0, %s109
      %s111 = sphi 0, %s109
      %s112 = sphi 0, %s111
      %s126 = sphi 0, %s112
      %s130 = sphi 0, %s130
      %s132 = sphi 0, %s130
      %s133 = sphi 0, %s132
      %s147 = sphi 0, %s133
      %s153 = sphi 0, %s155
      %s156 = sphi 0, %s153
      %s157 = sphi 0, %s156
      %s173 = sphi 0, %s157
    $region4: #{tpu_custom_call.1} parent=1 // loop_header_branch
      %15 = sbr.rel (%p13) target = $region8
    $region5: #{tpu_custom_call.1} parent=1 // loop_body
      %s17 = ssub.s32 %s12, 1
      %s18 = ssub.s32 %s12, 2
      %s19 = sadd.s32 %s12, 1
      %s20 = ssub.s32 %s12, %s19
      %p21 = scmp.eq.s32.totalorder %s20, 0
      %s23 = sadd.s32 %s22, 1
      %s24 = scalar_select %p21, %s22, %s23
      %p27 = pneg %p21
      %p28 = scmp.eq.s32.totalorder %s12, 1
      %p29 = por %p27, %p28
      %p30 = scmp.ne.s32.totalorder %s22, %s25
      %p31 = scmp.eq.s32.totalorder %s12, 0
      %p32 = por %p30, %p31
      %p33 = scmp.ne.s32.totalorder %s22, %s25
      %p34 = scmp.eq.s32.totalorder %s17, 1
      %p35 = por %p33, %p34
      %p36 = scmp.ne.s32.totalorder %s25, %s26
      %p37 = scmp.eq.s32.totalorder %s17, 0
      %p38 = por %p36, %p37
      %p39 = scmp.ne.s32.totalorder %s25, %s26
      %p40 = scmp.eq.s32.totalorder %s18, 1
      %p41 = por %p39, %p40
      %p43 = scmp.ne.s32.totalorder %s26, %s42
      %p44 = scmp.eq.s32.totalorder %s18, 0
      %p45 = por %p43, %p44
      %s47 = sadd.s32 %s46, 1
      %p50 = scmp.eq.s32.totalorder %s12, 1
      %p51 = scmp.ne.s32.totalorder %s46, %s48
      %p52 = scmp.eq.s32.totalorder %s12, 0
      %p53 = por %p51, %p52
      %p54 = scmp.ne.s32.totalorder %s46, %s48
      %p55 = scmp.eq.s32.totalorder %s17, 1
      %p56 = por %p54, %p55
      %p57 = scmp.ne.s32.totalorder %s48, %s49
      %p58 = scmp.eq.s32.totalorder %s17, 0
      %p59 = por %p57, %p58
      %p60 = scmp.ne.s32.totalorder %s48, %s49
      %p61 = scmp.eq.s32.totalorder %s18, 1
      %p62 = por %p60, %p61
      %p64 = scmp.ne.s32.totalorder %s49, %s63
      %p65 = scmp.eq.s32.totalorder %s18, 0
      %p66 = por %p64, %p65
      %s68 = sadd.s32 %s67, 1
      %p71 = scmp.eq.s32.totalorder %s12, 1
      %p72 = scmp.ne.s32.totalorder %s67, %s69
      %p73 = scmp.eq.s32.totalorder %s12, 0
      %p74 = por %p72, %p73
      %p75 = scmp.ne.s32.totalorder %s67, %s69
      %p76 = scmp.eq.s32.totalorder %s17, 1
      %p77 = por %p75, %p76
      %p78 = scmp.ne.s32.totalorder %s69, %s70
      %p79 = scmp.eq.s32.totalorder %s17, 0
      %p80 = por %p78, %p79
      %p81 = scmp.ne.s32.totalorder %s69, %s70
      %p82 = scmp.eq.s32.totalorder %s18, 1
      %p83 = por %p81, %p82
      %p85 = scmp.ne.s32.totalorder %s70, %s84
      %p86 = scmp.eq.s32.totalorder %s18, 0
      %p87 = por %p85, %p86
      %s89 = sadd.s32 %s88, 1
      %p92 = scmp.eq.s32.totalorder %s12, 1
      %p93 = scmp.ne.s32.totalorder %s88, %s90
      %p94 = scmp.eq.s32.totalorder %s12, 0
      %p95 = por %p93, %p94
      %p96 = scmp.ne.s32.totalorder %s88, %s90
      %p97 = scmp.eq.s32.totalorder %s17, 1
      %p98 = por %p96, %p97
      %p99 = scmp.ne.s32.totalorder %s90, %s91
      %p100 = scmp.eq.s32.totalorder %s17, 0
      %p101 = por %p99, %p100
      %p102 = scmp.ne.s32.totalorder %s90, %s91
      %p103 = scmp.eq.s32.totalorder %s18, 1
      %p104 = por %p102, %p103
      %p106 = scmp.ne.s32.totalorder %s91, %s105
      %p107 = scmp.eq.s32.totalorder %s18, 0
      %p108 = por %p106, %p107
      %s110 = sadd.s32 %s109, 1
      %p113 = scmp.eq.s32.totalorder %s12, 1
      %p114 = scmp.ne.s32.totalorder %s109, %s111
      %p115 = scmp.eq.s32.totalorder %s12, 0
      %p116 = por %p114, %p115
      %p117 = scmp.ne.s32.totalorder %s109, %s111
      %p118 = scmp.eq.s32.totalorder %s17, 1
      %p119 = por %p117, %p118
      %p120 = scmp.ne.s32.totalorder %s111, %s112
      %p121 = scmp.eq.s32.totalorder %s17, 0
      %p122 = por %p120, %p121
      %p123 = scmp.ne.s32.totalorder %s111, %s112
      %p124 = scmp.eq.s32.totalorder %s18, 1
      %p125 = por %p123, %p124
      %p127 = scmp.ne.s32.totalorder %s112, %s126
      %p128 = scmp.eq.s32.totalorder %s18, 0
      %p129 = por %p127, %p128
      %s131 = sadd.s32 %s130, 1
      %p134 = scmp.eq.s32.totalorder %s12, 1
      %p135 = scmp.ne.s32.totalorder %s130, %s132
      %p136 = scmp.eq.s32.totalorder %s12, 0
      %p137 = por %p135, %p136
      %p138 = scmp.ne.s32.totalorder %s130, %s132
      %p139 = scmp.eq.s32.totalorder %s17, 1
      %p140 = por %p138, %p139
      %p141 = scmp.ne.s32.totalorder %s132, %s133
      %p142 = scmp.eq.s32.totalorder %s17, 0
      %p143 = por %p141, %p142
      %p144 = scmp.ne.s32.totalorder %s132, %s133
      %p145 = scmp.eq.s32.totalorder %s18, 1
      %p146 = por %p144, %p145
      %p148 = scmp.ne.s32.totalorder %s133, %s147
      %p149 = scmp.eq.s32.totalorder %s18, 0
      %p150 = por %p148, %p149
      %s151 = ssub.s32 %s12, %s19
      %p152 = scmp.eq.s32.totalorder %s151, 0
      %s154 = sadd.s32 %s153, 1
      %s155 = scalar_select %p152, %s153, %s154
      %p158 = pneg %p152
      %p159 = scmp.eq.s32.totalorder %s12, 1
      %p160 = por %p158, %p159
      %p161 = scmp.ne.s32.totalorder %s153, %s156
      %p162 = scmp.eq.s32.totalorder %s12, 0
      %p163 = por %p161, %p162
      %p164 = scmp.ne.s32.totalorder %s153, %s156
      %p165 = scmp.eq.s32.totalorder %s17, 1
      %p166 = por %p164, %p165
      %p167 = scmp.ne.s32.totalorder %s156, %s157
      %p168 = scmp.eq.s32.totalorder %s17, 0
      %p169 = por %p167, %p168
      %p170 = scmp.ne.s32.totalorder %s156, %s157
      %p171 = scmp.eq.s32.totalorder %s18, 1
      %p172 = por %p170, %p171
      %p174 = scmp.ne.s32.totalorder %s157, %s173
      %p175 = scmp.eq.s32.totalorder %s18, 0
      %p176 = por %p174, %p175
      %p177 = scmp.le.s32.totalorder 1, %s12
      %p178 = scmp.lt.s32.totalorder %s12, 3
      %p179 = pnand %p177, %p178
      %p180 = pneg %p179
      // Predicated region
      $region9: #{tpu_custom_call.1} parent=5 // pred_check
        _
      $region10: #{tpu_custom_call.1} parent=5 // pred_check_branch
        %182 = sbr.rel (%p179) target = $region12
      $region11: #{tpu_custom_call.1} parent=5 // pred_region
        %s183 = ssub.s32 %s12, 1
        // Predicated region
        $region13: #{tpu_custom_call.1} parent=11 // pred_check
          %p184 = pneg %p59
        $region14: #{tpu_custom_call.1} parent=11 // pred_check_branch
          %186 = sbr.rel (%p184) target = $region16
        $region15: #{tpu_custom_call.1} parent=11 // pred_region
          _
        $region16: #{tpu_custom_call.1} parent=11 // pred_fallthru
          _
        // Predicated region
        $region17: #{tpu_custom_call.1} parent=11 // pred_check
          %p187 = pneg %p80
        $region18: #{tpu_custom_call.1} parent=11 // pred_check_branch
          %189 = sbr.rel (%p187) target = $region20
        $region19: #{tpu_custom_call.1} parent=11 // pred_region
          _
        $region20: #{tpu_custom_call.1} parent=11 // pred_fallthru
          _
        // Predicated region
        $region21: #{tpu_custom_call.1} parent=11 // pred_check
          %p190 = pneg %p101
        $region22: #{tpu_custom_call.1} parent=11 // pred_check_branch
          %192 = sbr.rel (%p190) target = $region24
        $region23: #{tpu_custom_call.1} parent=11 // pred_region
          _
        $region24: #{tpu_custom_call.1} parent=11 // pred_fallthru
          _
        // Predicated region
        $region25: #{tpu_custom_call.1} parent=11 // pred_check
          %p193 = pneg %p122
        $region26: #{tpu_custom_call.1} parent=11 // pred_check_branch
          %195 = sbr.rel (%p193) target = $region28
        $region27: #{tpu_custom_call.1} parent=11 // pred_region
          _
        $region28: #{tpu_custom_call.1} parent=11 // pred_fallthru
          _
        // Predicated region
        $region29: #{tpu_custom_call.1} parent=11 // pred_check
          %p196 = pneg %p143
        $region30: #{tpu_custom_call.1} parent=11 // pred_check_branch
          %198 = sbr.rel (%p196) target = $region32
        $region31: #{tpu_custom_call.1} parent=11 // pred_region
          _
        $region32: #{tpu_custom_call.1} parent=11 // pred_fallthru
          _
      $region12: #{tpu_custom_call.1} parent=5 // pred_fallthru
        _
      %p199 = scmp.lt.s32.totalorder %s12, 2
      // Predicated region
      $region33: #{tpu_custom_call.1} parent=5 // pred_check
        %p200 = pneg %p199
      $region34: #{tpu_custom_call.1} parent=5 // pred_check_branch
        %202 = sbr.rel (%p200) target = $region36
      $region35: #{tpu_custom_call.1} parent=5 // pred_region
        // Predicated region
        $region37: #{tpu_custom_call.1} parent=35 // pred_check
          %p203 = pneg %p32
        $region38: #{tpu_custom_call.1} parent=35 // pred_check_branch
          %205 = sbr.rel (%p203) target = $region40
        $region39: #{tpu_custom_call.1} parent=35 // pred_region
          %s206 = sand.u32 %s22, 1
          %s207 = sand.u32 %s22, 1
          %s208 = smul.addr %s207, 64
          %s209 = scalar_lea.vmem [#allocation7], %s208
          %s210 = smul.addr %s12, 8
          %s211 = scalar_lea.vmem %s0, %s210
          // Predicated region
          $region41: #{tpu_custom_call.1} parent=39 // pred_check
            _
          $region42: #{tpu_custom_call.1} parent=39 // pred_check_branch
            %213 = sbr.rel (0) target = $region44
          $region43: #{tpu_custom_call.1} parent=39 // pred_region
            // Predicated region
            $region45: #{tpu_custom_call.1} parent=43 // pred_check
              _
            $region46: #{tpu_custom_call.1} parent=43 // pred_check_branch
              %215 = sbr.rel (0) target = $region48
            $region47: #{tpu_custom_call.1} parent=43 // pred_region
              // Predicated region
              $region60: #{tpu_custom_call.1} parent=47 // pred_check
                _
              $region61: #{tpu_custom_call.1} parent=47 // pred_check_branch
                %245 = sbr.rel (0) target = $region63
              $region62: #{tpu_custom_call.1} parent=47 // pred_region
                loop: start=0, step=1, limit=1
                $region64: #{tpu_custom_call.1} parent=62 // loop_pre_header
                  _
                $region65: #{tpu_custom_call.1} parent=62 // loop_header
                  %s247 = sphi 0, %s251
                  %p248 = scmp.ge.s32.totalorder %s247, 1
                  %s252 = sphi %s211, %s211
                  %s253 = sphi %s209, %s209
                $region66: #{tpu_custom_call.1} parent=62 // loop_header_branch
                  %250 = sbr.rel (%p248) target = $region70
                $region67: #{tpu_custom_call.1} parent=62 // loop_body
                  %v254 = vld [vmem:[%s252] sm:$0xff]
                  %255 = vst [vmem:[%s253] sm:$0xff] %v254
                  %v256 = vld [vmem:[%s252 + $0x10] sm:$0xff]
                  %257 = vst [vmem:[%s253 + $0x8] sm:$0xff] %v256
                  %v258 = vld [vmem:[%s252 + $0x20] sm:$0xff]
                  %259 = vst [vmem:[%s253 + $0x10] sm:$0xff] %v258
                  %v260 = vld [vmem:[%s252 + $0x30] sm:$0xff]
                  %261 = vst [vmem:[%s253 + $0x18] sm:$0xff] %v260
                  %v262 = vld [vmem:[%s252 + $0x40] sm:$0xff]
                  %263 = vst [vmem:[%s253 + $0x20] sm:$0xff] %v262
                  %v264 = vld [vmem:[%s252 + $0x50] sm:$0xff]
                  %265 = vst [vmem:[%s253 + $0x28] sm:$0xff] %v264
                  %v266 = vld [vmem:[%s252 + $0x60] sm:$0xff]
                  %267 = vst [vmem:[%s253 + $0x30] sm:$0xff] %v266
                  %v268 = vld [vmem:[%s252 + $0x70] sm:$0xff]
                  %269 = vst [vmem:[%s253 + $0x38] sm:$0xff] %v268
                $region68: #{tpu_custom_call.1} parent=62 // loop_footer
                  %s251 = sadd.s32 1, %s247
                $region69: #{tpu_custom_call.1} parent=62 // loop_footer_branch
                  %246 = sbr.rel target = $region65
                $region70: #{tpu_custom_call.1} parent=62 // loop_exit
                  _
              $region63: #{tpu_custom_call.1} parent=47 // pred_fallthru
                _
              // Predicated region
              $region71: #{tpu_custom_call.1} parent=47 // pred_check
                _
              $region72: #{tpu_custom_call.1} parent=47 // pred_check_branch
                %271 = sbr.rel target = $region74
              $region73: #{tpu_custom_call.1} parent=47 // pred_region
                _
              $region74: #{tpu_custom_call.1} parent=47 // pred_fallthru
                _
            $region48: #{tpu_custom_call.1} parent=43 // pred_fallthru
              _
            // Predicated region
            $region49: #{tpu_custom_call.1} parent=43 // pred_check
              _
            $region50: #{tpu_custom_call.1} parent=43 // pred_check_branch
              %217 = sbr.rel target = $region52
            $region51: #{tpu_custom_call.1} parent=43 // pred_region
              %s219 = ssub.s32 256, 1
              loop: start=0, step=1, limit=1
              $region53: #{tpu_custom_call.1} parent=51 // loop_pre_header
                _
              $region54: #{tpu_custom_call.1} parent=51 // loop_header
                %s221 = sphi 0, %s225
                %p222 = scmp.ge.s32.totalorder %s221, 1
                %s226 = sphi %s211, %s211
                %s227 = sphi %s209, %s209
              $region55: #{tpu_custom_call.1} parent=51 // loop_header_branch
                %224 = sbr.rel (%p222) target = $region59
              $region56: #{tpu_custom_call.1} parent=51 // loop_body
                %v228 = vld [vmem:[%s226] sm:%s219]
                %229 = vst [vmem:[%s227] sm:%s219] %v228
                %v230 = vld [vmem:[%s226 + $0x10] sm:%s219]
                %231 = vst [vmem:[%s227 + $0x8] sm:%s219] %v230
                %v232 = vld [vmem:[%s226 + $0x20] sm:%s219]
                %233 = vst [vmem:[%s227 + $0x10] sm:%s219] %v232
                %v234 = vld [vmem:[%s226 + $0x30] sm:%s219]
                %235 = vst [vmem:[%s227 + $0x18] sm:%s219] %v234
                %v236 = vld [vmem:[%s226 + $0x40] sm:%s219]
                %237 = vst [vmem:[%s227 + $0x20] sm:%s219] %v236
                %v238 = vld [vmem:[%s226 + $0x50] sm:%s219]
                %239 = vst [vmem:[%s227 + $0x28] sm:%s219] %v238
                %v240 = vld [vmem:[%s226 + $0x60] sm:%s219]
                %241 = vst [vmem:[%s227 + $0x30] sm:%s219] %v240
                %v242 = vld [vmem:[%s226 + $0x70] sm:%s219]
                %243 = vst [vmem:[%s227 + $0x38] sm:%s219] %v242
              $region57: #{tpu_custom_call.1} parent=51 // loop_footer
                %s225 = sadd.s32 1, %s221
              $region58: #{tpu_custom_call.1} parent=51 // loop_footer_branch
                %220 = sbr.rel target = $region54
              $region59: #{tpu_custom_call.1} parent=51 // loop_exit
                _
            $region52: #{tpu_custom_call.1} parent=43 // pred_fallthru
              _
          $region44: #{tpu_custom_call.1} parent=39 // pred_fallthru
            _
          %272 = vnop
        $region40: #{tpu_custom_call.1} parent=35 // pred_fallthru
          _
      $region36: #{tpu_custom_call.1} parent=5 // pred_fallthru
        _
      %p273 = scmp.le.s32.totalorder 1, %s12
      %p274 = scmp.lt.s32.totalorder %s12, 3
      %p275 = pnand %p273, %p274
      %p276 = pneg %p275
      // Predicated region
      $region75: #{tpu_custom_call.1} parent=5 // pred_check
        _
      $region76: #{tpu_custom_call.1} parent=5 // pred_check_branch
        %278 = sbr.rel (%p275) target = $region78
      $region77: #{tpu_custom_call.1} parent=5 // pred_region
        %s279 = ssub.s32 %s12, 1
        %s280 = sand.u32 %s25, 1
        %s281 = sand.u32 %s25, 1
        %s282 = smul.addr %s281, 64
        %s283 = scalar_lea.vmem [#allocation7], %s282
        // Predicated region
        $region79: #{tpu_custom_call.1} parent=77 // pred_check
          %p284 = pneg %p38
        $region80: #{tpu_custom_call.1} parent=77 // pred_check_branch
          %286 = sbr.rel (%p284) target = $region82
        $region81: #{tpu_custom_call.1} parent=77 // pred_region
          _
        $region82: #{tpu_custom_call.1} parent=77 // pred_fallthru
          _
        %s287 = sand.u32 %s25, 1
        %s288 = sand.u32 %s25, 1
        %s289 = smul.addr %s288, 64
        %s290 = scalar_lea.vmem [#allocation7], %s289
        %p291 = pneg %p38
        %p292 = pneg %p35
        %p293 = pneg %p59
        %p294 = pneg %p56
        %p295 = pneg %p80
        %p296 = pneg %p77
        %p297 = pneg %p101
        %p298 = pneg %p98
        %p299 = pneg %p122
        %p300 = pneg %p119
        %p301 = pneg %p143
        %p302 = pneg %p140
        %p303 = pneg %p169
        %p304 = pneg %p166
        %s305 = sand.u32 %s156, 1
        %s306 = sand.u32 %s156, 1
        %s307 = smul.addr %s306, 64
        %s308 = scalar_lea.vmem [#allocation8], %s307
        %v309 = vld [vmem:[%s283] sm:$0xff]
        %v310 = vld [vmem:[%s283 + $0x8] sm:$0xff]
        %v311 = vld [vmem:[%s283 + $0x10] sm:$0xff]
        %v312 = vld [vmem:[%s283 + $0x18] sm:$0xff]
        %v313 = vld [vmem:[%s283 + $0x20] sm:$0xff]
        %v314 = vld [vmem:[%s283 + $0x28] sm:$0xff]
        %v315 = vld [vmem:[%s283 + $0x30] sm:$0xff]
        %v316 = vld [vmem:[%s283 + $0x38] sm:$0xff]
        %v317 = vld [vmem:[%s1] sm:$0xff]
        %v318 = vld [vmem:[%s1 + $0x8] sm:$0x7f]
        %v319 = vld [vmem:[%s3] sm:$0x1]
        %v321 = vperm.slane %v319, 0
        %vm323 = vcmask 121856
        %v325 = vsel %vm323, %v309, 0
        %v328 = vsel %vm323, %v310, 0
        %v331 = vsel %vm323, %v311, 0
        %v334 = vsel %vm323, %v312, 0
        %v337 = vsel %vm323, %v313, 0
        %v340 = vsel %vm323, %v314, 0
        %v343 = vsel %vm323, %v315, 0
        %v346 = vsel %vm323, %v316, 0
        %vm348 = vcmask 1046528
        %v350 = vsel %vm348, %v318, 0
        %352 = vmatpush.msra.mxu0 0.0
        %353 = vmatpush.msra.mxu0 0.0
        %354 = vmatpush.msra.mxu0 0.0
        %355 = vmatpush.msra.mxu0 0.0
        %356 = vmatpush.msra.mxu0 0.0
        %357 = vmatpush.msra.mxu0 0.0
        %358 = vmatpush.msra.mxu0 0.0
        %359 = vmatpush.msra.mxu0 0.0
        %360 = vmatpush.msra.mxu0 0.0
        %361 = vmatpush.msra.mxu0 0.0
        %362 = vmatpush.msra.mxu0 0.0
        %363 = vmatpush.msra.mxu0 0.0
        %364 = vmatpush.msra.mxu0 0.0
        %365 = vmatpush.msra.mxu0 0.0
        %366 = vmatpush.msra.mxu0 %v350
        %367 = vmatpush.msra.mxu0 %v317
        %368 = vmatmul.f32.gmra.mxu0 %v325
        %v369 = vpop.f32.mrf.mxu0
        %v370 = vadd.f32 %v321, %v369
        %371 = vmatmul.f32.gmra.mxu0 %v328
        %v372 = vpop.f32.mrf.mxu0
        %v373 = vadd.f32 %v321, %v372
        %374 = vmatmul.f32.gmra.mxu0 %v331
        %v375 = vpop.f32.mrf.mxu0
        %v376 = vadd.f32 %v321, %v375
        %377 = vmatmul.f32.gmra.mxu0 %v334
        %v378 = vpop.f32.mrf.mxu0
        %v379 = vadd.f32 %v321, %v378
        %380 = vmatmul.f32.gmra.mxu0 %v337
        %v381 = vpop.f32.mrf.mxu0
        %v382 = vadd.f32 %v321, %v381
        %383 = vmatmul.f32.gmra.mxu0 %v340
        %v384 = vpop.f32.mrf.mxu0
        %v385 = vadd.f32 %v321, %v384
        %386 = vmatmul.f32.gmra.mxu0 %v343
        %v387 = vpop.f32.mrf.mxu0
        %v388 = vadd.f32 %v321, %v387
        %389 = vmatmul.f32.gmra.mxu0 %v346
        %v390 = vpop.f32.mrf.mxu0
        %v391 = vadd.f32 %v321, %v390
        %392 = vdwg.mxu0
        %vm393 = vcmask 130048
        %394 = vst.msk [vmem:[#allocation2] sm:$0xff] %vm393, %v370
        %395 = vst.msk [vmem:[#allocation2 + $0x8] sm:$0xff] %vm393, %v373
        %396 = vst.msk [vmem:[#allocation2 + $0x10] sm:$0xff] %vm393, %v376
        %397 = vst.msk [vmem:[#allocation2 + $0x18] sm:$0xff] %vm393, %v379
        %398 = vst.msk [vmem:[#allocation2 + $0x20] sm:$0xff] %vm393, %v382
        %399 = vst.msk [vmem:[#allocation2 + $0x28] sm:$0xff] %vm393, %v385
        %400 = vst.msk [vmem:[#allocation2 + $0x30] sm:$0xff] %vm393, %v388
        %401 = vst.msk [vmem:[#allocation2 + $0x38] sm:$0xff] %vm393, %v391
        %410 = vrot.lane.b32.xlu0 %v370, 112
        %v411 = vpop.permute.xlu0 %410
        %412 = vrot.lane.b32.xlu0 %v373, 112
        %v413 = vpop.permute.xlu0 %412
        %414 = vrot.lane.b32.xlu0 %v376, 112
        %v415 = vpop.permute.xlu0 %414
        %416 = vrot.lane.b32.xlu0 %v379, 112
        %v417 = vpop.permute.xlu0 %416
        %418 = vrot.lane.b32.xlu0 %v382, 112
        %v419 = vpop.permute.xlu0 %418
        %420 = vrot.lane.b32.xlu0 %v385, 112
        %v421 = vpop.permute.xlu0 %420
        %422 = vrot.lane.b32.xlu0 %v388, 112
        %v423 = vpop.permute.xlu0 %422
        %424 = vrot.lane.b32.xlu0 %v391, 112
        %v425 = vpop.permute.xlu0 %424
        %434 = vst.msk [vmem:[#allocation3] sm:$0xff] %vm393, %v411
        %435 = vst.msk [vmem:[#allocation3 + $0x8] sm:$0xff] %vm393, %v413
        %436 = vst.msk [vmem:[#allocation3 + $0x10] sm:$0xff] %vm393, %v415
        %437 = vst.msk [vmem:[#allocation3 + $0x18] sm:$0xff] %vm393, %v417
        %438 = vst.msk [vmem:[#allocation3 + $0x20] sm:$0xff] %vm393, %v419
        %439 = vst.msk [vmem:[#allocation3 + $0x28] sm:$0xff] %vm393, %v421
        %440 = vst.msk [vmem:[#allocation3 + $0x30] sm:$0xff] %vm393, %v423
        %441 = vst.msk [vmem:[#allocation3 + $0x38] sm:$0xff] %vm393, %v425
        %442 = vrot.lane.b32.xlu0 %v370, 96
        %v443 = vpop.permute.xlu0 %442
        %444 = vrot.lane.b32.xlu0 %v373, 96
        %v445 = vpop.permute.xlu0 %444
        %446 = vrot.lane.b32.xlu0 %v376, 96
        %v447 = vpop.permute.xlu0 %446
        %448 = vrot.lane.b32.xlu0 %v379, 96
        %v449 = vpop.permute.xlu0 %448
        %450 = vrot.lane.b32.xlu0 %v382, 96
        %v451 = vpop.permute.xlu0 %450
        %452 = vrot.lane.b32.xlu0 %v385, 96
        %v453 = vpop.permute.xlu0 %452
        %454 = vrot.lane.b32.xlu0 %v388, 96
        %v455 = vpop.permute.xlu0 %454
        %456 = vrot.lane.b32.xlu0 %v391, 96
        %v457 = vpop.permute.xlu0 %456
        %466 = vst.msk [vmem:[#allocation4] sm:$0xff] %vm393, %v443
        %467 = vst.msk [vmem:[#allocation4 + $0x8] sm:$0xff] %vm393, %v445
        %468 = vst.msk [vmem:[#allocation4 + $0x10] sm:$0xff] %vm393, %v447
        %469 = vst.msk [vmem:[#allocation4 + $0x18] sm:$0xff] %vm393, %v449
        %470 = vst.msk [vmem:[#allocation4 + $0x20] sm:$0xff] %vm393, %v451
        %471 = vst.msk [vmem:[#allocation4 + $0x28] sm:$0xff] %vm393, %v453
        %472 = vst.msk [vmem:[#allocation4 + $0x30] sm:$0xff] %vm393, %v455
        %473 = vst.msk [vmem:[#allocation4 + $0x38] sm:$0xff] %vm393, %v457
        %474 = vrot.lane.b32.xlu0 %v370, 80
        %v475 = vpop.permute.xlu0 %474
        %476 = vrot.lane.b32.xlu0 %v373, 80
        %v477 = vpop.permute.xlu0 %476
        %478 = vrot.lane.b32.xlu0 %v376, 80
        %v479 = vpop.permute.xlu0 %478
        %480 = vrot.lane.b32.xlu0 %v379, 80
        %v481 = vpop.permute.xlu0 %480
        %482 = vrot.lane.b32.xlu0 %v382, 80
        %v483 = vpop.permute.xlu0 %482
        %484 = vrot.lane.b32.xlu0 %v385, 80
        %v485 = vpop.permute.xlu0 %484
        %486 = vrot.lane.b32.xlu0 %v388, 80
        %v487 = vpop.permute.xlu0 %486
        %488 = vrot.lane.b32.xlu0 %v391, 80
        %v489 = vpop.permute.xlu0 %488
        %498 = vst.msk [vmem:[#allocation5] sm:$0xff] %vm393, %v475
        %499 = vst.msk [vmem:[#allocation5 + $0x8] sm:$0xff] %vm393, %v477
        %500 = vst.msk [vmem:[#allocation5 + $0x10] sm:$0xff] %vm393, %v479
        %501 = vst.msk [vmem:[#allocation5 + $0x18] sm:$0xff] %vm393, %v481
        %502 = vst.msk [vmem:[#allocation5 + $0x20] sm:$0xff] %vm393, %v483
        %503 = vst.msk [vmem:[#allocation5 + $0x28] sm:$0xff] %vm393, %v485
        %504 = vst.msk [vmem:[#allocation5 + $0x30] sm:$0xff] %vm393, %v487
        %505 = vst.msk [vmem:[#allocation5 + $0x38] sm:$0xff] %vm393, %v489
        %v506 = vld [vmem:[%s2] sm:$0xff]
        %v507 = vld [vmem:[%s2 + $0x8] sm:$0xff]
        %v508 = vld [vmem:[#allocation2] sm:$0xff]
        %v510 = vsel %vm393, 0.0, 0
        %512 = vmatpush.msra.mxu0 0.0
        %513 = vmatpush.msra.mxu0 0.0
        %514 = vmatpush.msra.mxu0 0.0
        %515 = vmatpush.msra.mxu0 0.0
        %516 = vmatpush.msra.mxu0 0.0
        %517 = vmatpush.msra.mxu0 0.0
        %518 = vmatpush.msra.mxu0 0.0
        %519 = vmatpush.msra.mxu0 0.0
        %520 = vmatpush.msra.mxu0 0.0
        %521 = vmatpush.msra.mxu0 0.0
        %522 = vmatpush.msra.mxu0 0.0
        %523 = vmatpush.msra.mxu0 0.0
        %524 = vmatpush.msra.mxu0 0.0
        %525 = vmatpush.msra.mxu0 0.0
        %526 = vmatpush.msra.mxu0 %v507
        %527 = vmatpush.msra.mxu0 %v506
        %528 = vmatmul.f32.gmra.mxu0 %v510
        %v529 = vpop.f32.mrf.mxu0
        %v530 = vadd.f32 0.0, %v529
        %531 = vdwg.mxu0
        %v532 = vadd.f32 %v508, %v530
        %v533 = vxor.u32 %v532, 2147483648
        %v534 = vmul.f32 %v533, 1.442695
        %v535 = vpow.pop %v534
        %v536 = vadd.f32 %v535, 1.0
        %v537 = vrcp.pop %v536
        %v538 = vmul.f32 %v536, %v537
        %v539 = vsub.f32 1.0, %v538
        %v540 = vmul.f32 %v537, %v539
        %v541 = vadd.f32 %v537, %v540
        %vm542 = vweird.f32 %v536
        %vm543 = vweird.f32 %v537
        %vm544 = vmor %vm542, %vm543
        %v545 = vsel %vm544, %v537, %v541
        %v546 = vand.u32 2147483647, %v536
        %vm547 = vcmp.eq.f32.partialorder %v546, 8.507059e+37
        %v548 = vand.u32 %v536, 2147483648
        %v549 = vor.u32 1.1754944e-38, %v548
        %v550 = vsel %vm547, %v549, %v545
        %v551 = vmul.f32 1.0, %v550
        %v552 = vld [vmem:[#allocation3] sm:$0xff]
        %555 = vrot.lane.b32.xlu0 %v506, 112
        %v556 = vpop.permute.xlu0 %555
        %557 = vrot.lane.b32.xlu0 %v507, 112
        %v558 = vpop.permute.xlu0 %557
        %561 = vmatpush.msra.mxu0 0.0
        %562 = vmatpush.msra.mxu0 0.0
        %563 = vmatpush.msra.mxu0 0.0
        %564 = vmatpush.msra.mxu0 0.0
        %565 = vmatpush.msra.mxu0 0.0
        %566 = vmatpush.msra.mxu0 0.0
        %567 = vmatpush.msra.mxu0 0.0
        %568 = vmatpush.msra.mxu0 0.0
        %569 = vmatpush.msra.mxu0 0.0
        %570 = vmatpush.msra.mxu0 0.0
        %571 = vmatpush.msra.mxu0 0.0
        %572 = vmatpush.msra.mxu0 0.0
        %573 = vmatpush.msra.mxu0 0.0
        %574 = vmatpush.msra.mxu0 0.0
        %575 = vmatpush.msra.mxu0 %v558
        %576 = vmatpush.msra.mxu0 %v556
        %577 = vmatmul.f32.gmra.mxu0 %v510
        %v578 = vpop.f32.mrf.mxu0
        %v579 = vadd.f32 0.0, %v578
        %580 = vdwg.mxu0
        %v581 = vadd.f32 %v552, %v579
        %v582 = vxor.u32 %v581, 2147483648
        %v583 = vmul.f32 %v582, 1.442695
        %v584 = vpow.pop %v583
        %v585 = vadd.f32 %v584, 1.0
        %v586 = vrcp.pop %v585
        %v587 = vmul.f32 %v585, %v586
        %v588 = vsub.f32 1.0, %v587
        %v589 = vmul.f32 %v586, %v588
        %v590 = vadd.f32 %v586, %v589
        %vm591 = vweird.f32 %v585
        %vm592 = vweird.f32 %v586
        %vm593 = vmor %vm591, %vm592
        %v594 = vsel %vm593, %v586, %v590
        %v595 = vand.u32 2147483647, %v585
        %vm596 = vcmp.eq.f32.partialorder %v595, 8.507059e+37
        %v597 = vand.u32 %v585, 2147483648
        %v598 = vor.u32 1.1754944e-38, %v597
        %v599 = vsel %vm596, %v598, %v594
        %v600 = vmul.f32 1.0, %v599
        %v601 = vld [vmem:[#allocation4] sm:$0xff]
        %602 = vrot.lane.b32.xlu0 %v506, 96
        %v603 = vpop.permute.xlu0 %602
        %604 = vrot.lane.b32.xlu0 %v507, 96
        %v605 = vpop.permute.xlu0 %604
        %608 = vmatpush.msra.mxu0 0.0
        %609 = vmatpush.msra.mxu0 0.0
        %610 = vmatpush.msra.mxu0 0.0
        %611 = vmatpush.msra.mxu0 0.0
        %612 = vmatpush.msra.mxu0 0.0
        %613 = vmatpush.msra.mxu0 0.0
        %614 = vmatpush.msra.mxu0 0.0
        %615 = vmatpush.msra.mxu0 0.0
        %616 = vmatpush.msra.mxu0 0.0
        %617 = vmatpush.msra.mxu0 0.0
        %618 = vmatpush.msra.mxu0 0.0
        %619 = vmatpush.msra.mxu0 0.0
        %620 = vmatpush.msra.mxu0 0.0
        %621 = vmatpush.msra.mxu0 0.0
        %622 = vmatpush.msra.mxu0 %v605
        %623 = vmatpush.msra.mxu0 %v603
        %624 = vmatmul.f32.gmra.mxu0 %v510
        %v625 = vpop.f32.mrf.mxu0
        %v626 = vadd.f32 0.0, %v625
        %627 = vdwg.mxu0
        %v628 = vadd.f32 %v601, %v626
        %v629 = vtanh.pop %v628
        %v630 = vld [vmem:[#allocation5] sm:$0xff]
        %631 = vrot.lane.b32.xlu0 %v506, 80
        %v632 = vpop.permute.xlu0 %631
        %633 = vrot.lane.b32.xlu0 %v507, 80
        %v634 = vpop.permute.xlu0 %633
        %637 = vmatpush.msra.mxu0 0.0
        %638 = vmatpush.msra.mxu0 0.0
        %639 = vmatpush.msra.mxu0 0.0
        %640 = vmatpush.msra.mxu0 0.0
        %641 = vmatpush.msra.mxu0 0.0
        %642 = vmatpush.msra.mxu0 0.0
        %643 = vmatpush.msra.mxu0 0.0
        %644 = vmatpush.msra.mxu0 0.0
        %645 = vmatpush.msra.mxu0 0.0
        %646 = vmatpush.msra.mxu0 0.0
        %647 = vmatpush.msra.mxu0 0.0
        %648 = vmatpush.msra.mxu0 0.0
        %649 = vmatpush.msra.mxu0 0.0
        %650 = vmatpush.msra.mxu0 0.0
        %651 = vmatpush.msra.mxu0 %v634
        %652 = vmatpush.msra.mxu0 %v632
        %653 = vmatmul.f32.gmra.mxu0 %v510
        %v654 = vpop.f32.mrf.mxu0
        %v655 = vadd.f32 0.0, %v654
        %656 = vdwg.mxu0
        %v657 = vadd.f32 %v630, %v655
        %v658 = vxor.u32 %v657, 2147483648
        %v659 = vmul.f32 %v658, 1.442695
        %v660 = vpow.pop %v659
        %v661 = vadd.f32 %v660, 1.0
        %v662 = vrcp.pop %v661
        %v663 = vmul.f32 %v661, %v662
        %v664 = vsub.f32 1.0, %v663
        %v665 = vmul.f32 %v662, %v664
        %v666 = vadd.f32 %v662, %v665
        %vm667 = vweird.f32 %v661
        %vm668 = vweird.f32 %v662
        %vm669 = vmor %vm667, %vm668
        %v670 = vsel %vm669, %v662, %v666
        %v671 = vand.u32 2147483647, %v661
        %vm672 = vcmp.eq.f32.partialorder %v671, 8.507059e+37
        %v673 = vand.u32 %v661, 2147483648
        %v674 = vor.u32 1.1754944e-38, %v673
        %v675 = vsel %vm672, %v674, %v670
        %v676 = vmul.f32 1.0, %v675
        %v677 = vmul.f32 %v600, 0.0
        %v678 = vmul.f32 %v551, %v629
        %v679 = vadd.f32 %v677, %v678
        %v680 = vtanh.pop %v679
        %v681 = vmul.f32 %v676, %v680
        %682 = vst.msk [vmem:[#allocation6] sm:$0xff] %vm393, %v681
        %s683 = scalar_lea.vmem [#allocation2], 8
        %v684 = vld [vmem:[%s683] sm:$0xff]
        %v686 = vsel %vm393, %v681, 0
        %688 = vmatpush.msra.mxu0 0.0
        %689 = vmatpush.msra.mxu0 0.0
        %690 = vmatpush.msra.mxu0 0.0
        %691 = vmatpush.msra.mxu0 0.0
        %692 = vmatpush.msra.mxu0 0.0
        %693 = vmatpush.msra.mxu0 0.0
        %694 = vmatpush.msra.mxu0 0.0
        %695 = vmatpush.msra.mxu0 0.0
        %696 = vmatpush.msra.mxu0 0.0
        %697 = vmatpush.msra.mxu0 0.0
        %698 = vmatpush.msra.mxu0 0.0
        %699 = vmatpush.msra.mxu0 0.0
        %700 = vmatpush.msra.mxu0 0.0
        %701 = vmatpush.msra.mxu0 0.0
        %702 = vmatpush.msra.mxu0 %v507
        %703 = vmatpush.msra.mxu0 %v506
        %704 = vmatmul.f32.gmra.mxu0 %v686
        %v705 = vpop.f32.mrf.mxu0
        %v706 = vadd.f32 0.0, %v705
        %707 = vdwg.mxu0
        %v708 = vadd.f32 %v684, %v706
        %v709 = vxor.u32 %v708, 2147483648
        %v710 = vmul.f32 %v709, 1.442695
        %v711 = vpow.pop %v710
        %v712 = vadd.f32 %v711, 1.0
        %v713 = vrcp.pop %v712
        %v714 = vmul.f32 %v712, %v713
        %v715 = vsub.f32 1.0, %v714
        %v716 = vmul.f32 %v713, %v715
        %v717 = vadd.f32 %v713, %v716
        %vm718 = vweird.f32 %v712
        %vm719 = vweird.f32 %v713
        %vm720 = vmor %vm718, %vm719
        %v721 = vsel %vm720, %v713, %v717
        %v722 = vand.u32 2147483647, %v712
        %vm723 = vcmp.eq.f32.partialorder %v722, 8.507059e+37
        %v724 = vand.u32 %v712, 2147483648
        %v725 = vor.u32 1.1754944e-38, %v724
        %v726 = vsel %vm723, %v725, %v721
        %v727 = vmul.f32 1.0, %v726
        %s728 = scalar_lea.vmem [#allocation3], 8
        %v729 = vld [vmem:[%s728] sm:$0xff]
        %730 = vmatpush.msra.mxu0 0.0
        %731 = vmatpush.msra.mxu0 0.0
        %732 = vmatpush.msra.mxu0 0.0
        %733 = vmatpush.msra.mxu0 0.0
        %734 = vmatpush.msra.mxu0 0.0
        %735 = vmatpush.msra.mxu0 0.0
        %736 = vmatpush.msra.mxu0 0.0
        %737 = vmatpush.msra.mxu0 0.0
        %738 = vmatpush.msra.mxu0 0.0
        %739 = vmatpush.msra.mxu0 0.0
        %740 = vmatpush.msra.mxu0 0.0
        %741 = vmatpush.msra.mxu0 0.0
        %742 = vmatpush.msra.mxu0 0.0
        %743 = vmatpush.msra.mxu0 0.0
        %744 = vmatpush.msra.mxu0 %v558
        %745 = vmatpush.msra.mxu0 %v556
        %746 = vmatmul.f32.gmra.mxu0 %v686
        %v747 = vpop.f32.mrf.mxu0
        %v748 = vadd.f32 0.0, %v747
        %749 = vdwg.mxu0
        %v750 = vadd.f32 %v729, %v748
        %v751 = vxor.u32 %v750, 2147483648
        %v752 = vmul.f32 %v751, 1.442695
        %v753 = vpow.pop %v752
        %v754 = vadd.f32 %v753, 1.0
        %v755 = vrcp.pop %v754
        %v756 = vmul.f32 %v754, %v755
        %v757 = vsub.f32 1.0, %v756
        %v758 = vmul.f32 %v755, %v757
        %v759 = vadd.f32 %v755, %v758
        %vm760 = vweird.f32 %v754
        %vm761 = vweird.f32 %v755
        %vm762 = vmor %vm760, %vm761
        %v763 = vsel %vm762, %v755, %v759
        %v764 = vand.u32 2147483647, %v754
        %vm765 = vcmp.eq.f32.partialorder %v764, 8.507059e+37
        %v766 = vand.u32 %v754, 2147483648
        %v767 = vor.u32 1.1754944e-38, %v766
        %v768 = vsel %vm765, %v767, %v763
        %v769 = vmul.f32 1.0, %v768
        %s770 = scalar_lea.vmem [#allocation4], 8
        %v771 = vld [vmem:[%s770] sm:$0xff]
        %772 = vmatpush.msra.mxu0 0.0
        %773 = vmatpush.msra.mxu0 0.0
        %774 = vmatpush.msra.mxu0 0.0
        %775 = vmatpush.msra.mxu0 0.0
        %776 = vmatpush.msra.mxu0 0.0
        %777 = vmatpush.msra.mxu0 0.0
        %778 = vmatpush.msra.mxu0 0.0
        %779 = vmatpush.msra.mxu0 0.0
        %780 = vmatpush.msra.mxu0 0.0
        %781 = vmatpush.msra.mxu0 0.0
        %782 = vmatpush.msra.mxu0 0.0
        %783 = vmatpush.msra.mxu0 0.0
        %784 = vmatpush.msra.mxu0 0.0
        %785 = vmatpush.msra.mxu0 0.0
        %786 = vmatpush.msra.mxu0 %v605
        %787 = vmatpush.msra.mxu0 %v603
        %788 = vmatmul.f32.gmra.mxu0 %v686
        %v789 = vpop.f32.mrf.mxu0
        %v790 = vadd.f32 0.0, %v789
        %791 = vdwg.mxu0
        %v792 = vadd.f32 %v771, %v790
        %v793 = vtanh.pop %v792
        %s794 = scalar_lea.vmem [#allocation5], 8
        %v795 = vld [vmem:[%s794] sm:$0xff]
        %796 = vmatpush.msra.mxu0 0.0
        %797 = vmatpush.msra.mxu0 0.0
        %798 = vmatpush.msra.mxu0 0.0
        %799 = vmatpush.msra.mxu0 0.0
        %800 = vmatpush.msra.mxu0 0.0
        %801 = vmatpush.msra.mxu0 0.0
        %802 = vmatpush.msra.mxu0 0.0
        %803 = vmatpush.msra.mxu0 0.0
        %804 = vmatpush.msra.mxu0 0.0
        %805 = vmatpush.msra.mxu0 0.0
        %806 = vmatpush.msra.mxu0 0.0
        %807 = vmatpush.msra.mxu0 0.0
        %808 = vmatpush.msra.mxu0 0.0
        %809 = vmatpush.msra.mxu0 0.0
        %810 = vmatpush.msra.mxu0 %v634
        %811 = vmatpush.msra.mxu0 %v632
        %812 = vmatmul.f32.gmra.mxu0 %v686
        %v813 = vpop.f32.mrf.mxu0
        %v814 = vadd.f32 0.0, %v813
        %815 = vdwg.mxu0
        %v816 = vadd.f32 %v795, %v814
        %v817 = vxor.u32 %v816, 2147483648
        %v818 = vmul.f32 %v817, 1.442695
        %v819 = vpow.pop %v818
        %v820 = vadd.f32 %v819, 1.0
        %v821 = vrcp.pop %v820
        %v822 = vmul.f32 %v820, %v821
        %v823 = vsub.f32 1.0, %v822
        %v824 = vmul.f32 %v821, %v823
        %v825 = vadd.f32 %v821, %v824
        %vm826 = vweird.f32 %v820
        %vm827 = vweird.f32 %v821
        %vm828 = vmor %vm826, %vm827
        %v829 = vsel %vm828, %v821, %v825
        %v830 = vand.u32 2147483647, %v820
        %vm831 = vcmp.eq.f32.partialorder %v830, 8.507059e+37
        %v832 = vand.u32 %v820, 2147483648
        %v833 = vor.u32 1.1754944e-38, %v832
        %v834 = vsel %vm831, %v833, %v829
        %v835 = vmul.f32 1.0, %v834
        %v836 = vmul.f32 %v769, %v679
        %v837 = vmul.f32 %v727, %v793
        %v838 = vadd.f32 %v836, %v837
        %v839 = vtanh.pop %v838
        %v840 = vmul.f32 %v835, %v839
        %s841 = scalar_lea.vmem [#allocation6], 8
        %842 = vst.msk [vmem:[%s841] sm:$0xff] %vm393, %v840
        %s843 = scalar_lea.vmem [#allocation2], 16
        %v844 = vld [vmem:[%s843] sm:$0xff]
        %v846 = vsel %vm393, %v840, 0
        %848 = vmatpush.msra.mxu0 0.0
        %849 = vmatpush.msra.mxu0 0.0
        %850 = vmatpush.msra.mxu0 0.0
        %851 = vmatpush.msra.mxu0 0.0
        %852 = vmatpush.msra.mxu0 0.0
        %853 = vmatpush.msra.mxu0 0.0
        %854 = vmatpush.msra.mxu0 0.0
        %855 = vmatpush.msra.mxu0 0.0
        %856 = vmatpush.msra.mxu0 0.0
        %857 = vmatpush.msra.mxu0 0.0
        %858 = vmatpush.msra.mxu0 0.0
        %859 = vmatpush.msra.mxu0 0.0
        %860 = vmatpush.msra.mxu0 0.0
        %861 = vmatpush.msra.mxu0 0.0
        %862 = vmatpush.msra.mxu0 %v507
        %863 = vmatpush.msra.mxu0 %v506
        %864 = vmatmul.f32.gmra.mxu0 %v846
        %v865 = vpop.f32.mrf.mxu0
        %v866 = vadd.f32 0.0, %v865
        %867 = vdwg.mxu0
        %v868 = vadd.f32 %v844, %v866
        %v869 = vxor.u32 %v868, 2147483648
        %v870 = vmul.f32 %v869, 1.442695
        %v871 = vpow.pop %v870
        %v872 = vadd.f32 %v871, 1.0
        %v873 = vrcp.pop %v872
        %v874 = vmul.f32 %v872, %v873
        %v875 = vsub.f32 1.0, %v874
        %v876 = vmul.f32 %v873, %v875
        %v877 = vadd.f32 %v873, %v876
        %vm878 = vweird.f32 %v872
        %vm879 = vweird.f32 %v873
        %vm880 = vmor %vm878, %vm879
        %v881 = vsel %vm880, %v873, %v877
        %v882 = vand.u32 2147483647, %v872
        %vm883 = vcmp.eq.f32.partialorder %v882, 8.507059e+37
        %v884 = vand.u32 %v872, 2147483648
        %v885 = vor.u32 1.1754944e-38, %v884
        %v886 = vsel %vm883, %v885, %v881
        %v887 = vmul.f32 1.0, %v886
        %s888 = scalar_lea.vmem [#allocation3], 16
        %v889 = vld [vmem:[%s888] sm:$0xff]
        %890 = vmatpush.msra.mxu0 0.0
        %891 = vmatpush.msra.mxu0 0.0
        %892 = vmatpush.msra.mxu0 0.0
        %893 = vmatpush.msra.mxu0 0.0
        %894 = vmatpush.msra.mxu0 0.0
        %895 = vmatpush.msra.mxu0 0.0
        %896 = vmatpush.msra.mxu0 0.0
        %897 = vmatpush.msra.mxu0 0.0
        %898 = vmatpush.msra.mxu0 0.0
        %899 = vmatpush.msra.mxu0 0.0
        %900 = vmatpush.msra.mxu0 0.0
        %901 = vmatpush.msra.mxu0 0.0
        %902 = vmatpush.msra.mxu0 0.0
        %903 = vmatpush.msra.mxu0 0.0
        %904 = vmatpush.msra.mxu0 %v558
        %905 = vmatpush.msra.mxu0 %v556
        %906 = vmatmul.f32.gmra.mxu0 %v846
        %v907 = vpop.f32.mrf.mxu0
        %v908 = vadd.f32 0.0, %v907
        %909 = vdwg.mxu0
        %v910 = vadd.f32 %v889, %v908
        %v911 = vxor.u32 %v910, 2147483648
        %v912 = vmul.f32 %v911, 1.442695
        %v913 = vpow.pop %v912
        %v914 = vadd.f32 %v913, 1.0
        %v915 = vrcp.pop %v914
        %v916 = vmul.f32 %v914, %v915
        %v917 = vsub.f32 1.0, %v916
        %v918 = vmul.f32 %v915, %v917
        %v919 = vadd.f32 %v915, %v918
        %vm920 = vweird.f32 %v914
        %vm921 = vweird.f32 %v915
        %vm922 = vmor %vm920, %vm921
        %v923 = vsel %vm922, %v915, %v919
        %v924 = vand.u32 2147483647, %v914
        %vm925 = vcmp.eq.f32.partialorder %v924, 8.507059e+37
        %v926 = vand.u32 %v914, 2147483648
        %v927 = vor.u32 1.1754944e-38, %v926
        %v928 = vsel %vm925, %v927, %v923
        %v929 = vmul.f32 1.0, %v928
        %s930 = scalar_lea.vmem [#allocation4], 16
        %v931 = vld [vmem:[%s930] sm:$0xff]
        %932 = vmatpush.msra.mxu0 0.0
        %933 = vmatpush.msra.mxu0 0.0
        %934 = vmatpush.msra.mxu0 0.0
        %935 = vmatpush.msra.mxu0 0.0
        %936 = vmatpush.msra.mxu0 0.0
        %937 = vmatpush.msra.mxu0 0.0
        %938 = vmatpush.msra.mxu0 0.0
        %939 = vmatpush.msra.mxu0 0.0
        %940 = vmatpush.msra.mxu0 0.0
        %941 = vmatpush.msra.mxu0 0.0
        %942 = vmatpush.msra.mxu0 0.0
        %943 = vmatpush.msra.mxu0 0.0
        %944 = vmatpush.msra.mxu0 0.0
        %945 = vmatpush.msra.mxu0 0.0
        %946 = vmatpush.msra.mxu0 %v605
        %947 = vmatpush.msra.mxu0 %v603
        %948 = vmatmul.f32.gmra.mxu0 %v846
        %v949 = vpop.f32.mrf.mxu0
        %v950 = vadd.f32 0.0, %v949
        %951 = vdwg.mxu0
        %v952 = vadd.f32 %v931, %v950
        %v953 = vtanh.pop %v952
        %s954 = scalar_lea.vmem [#allocation5], 16
        %v955 = vld [vmem:[%s954] sm:$0xff]
        %956 = vmatpush.msra.mxu0 0.0
        %957 = vmatpush.msra.mxu0 0.0
        %958 = vmatpush.msra.mxu0 0.0
        %959 = vmatpush.msra.mxu0 0.0
        %960 = vmatpush.msra.mxu0 0.0
        %961 = vmatpush.msra.mxu0 0.0
        %962 = vmatpush.msra.mxu0 0.0
        %963 = vmatpush.msra.mxu0 0.0
        %964 = vmatpush.msra.mxu0 0.0
        %965 = vmatpush.msra.mxu0 0.0
        %966 = vmatpush.msra.mxu0 0.0
        %967 = vmatpush.msra.mxu0 0.0
        %968 = vmatpush.msra.mxu0 0.0
        %969 = vmatpush.msra.mxu0 0.0
        %970 = vmatpush.msra.mxu0 %v634
        %971 = vmatpush.msra.mxu0 %v632
        %972 = vmatmul.f32.gmra.mxu0 %v846
        %v973 = vpop.f32.mrf.mxu0
        %v974 = vadd.f32 0.0, %v973
        %975 = vdwg.mxu0
        %v976 = vadd.f32 %v955, %v974
        %v977 = vxor.u32 %v976, 2147483648
        %v978 = vmul.f32 %v977, 1.442695
        %v979 = vpow.pop %v978
        %v980 = vadd.f32 %v979, 1.0
        %v981 = vrcp.pop %v980
        %v982 = vmul.f32 %v980, %v981
        %v983 = vsub.f32 1.0, %v982
        %v984 = vmul.f32 %v981, %v983
        %v985 = vadd.f32 %v981, %v984
        %vm986 = vweird.f32 %v980
        %vm987 = vweird.f32 %v981
        %vm988 = vmor %vm986, %vm987
        %v989 = vsel %vm988, %v981, %v985
        %v990 = vand.u32 2147483647, %v980
        %vm991 = vcmp.eq.f32.partialorder %v990, 8.507059e+37
        %v992 = vand.u32 %v980, 2147483648
        %v993 = vor.u32 1.1754944e-38, %v992
        %v994 = vsel %vm991, %v993, %v989
        %v995 = vmul.f32 1.0, %v994
        %v996 = vmul.f32 %v929, %v838
        %v997 = vmul.f32 %v887, %v953
        %v998 = vadd.f32 %v996, %v997
        %v999 = vtanh.pop %v998
        %v1000 = vmul.f32 %v995, %v999
        %s1001 = scalar_lea.vmem [#allocation6], 16
        %1002 = vst.msk [vmem:[%s1001] sm:$0xff] %vm393, %v1000
        %s1003 = scalar_lea.vmem [#allocation2], 24
        %v1004 = vld [vmem:[%s1003] sm:$0xff]
        %v1006 = vsel %vm393, %v1000, 0
        %1008 = vmatpush.msra.mxu0 0.0
        %1009 = vmatpush.msra.mxu0 0.0
        %1010 = vmatpush.msra.mxu0 0.0
        %1011 = vmatpush.msra.mxu0 0.0
        %1012 = vmatpush.msra.mxu0 0.0
        %1013 = vmatpush.msra.mxu0 0.0
        %1014 = vmatpush.msra.mxu0 0.0
        %1015 = vmatpush.msra.mxu0 0.0
        %1016 = vmatpush.msra.mxu0 0.0
        %1017 = vmatpush.msra.mxu0 0.0
        %1018 = vmatpush.msra.mxu0 0.0
        %1019 = vmatpush.msra.mxu0 0.0
        %1020 = vmatpush.msra.mxu0 0.0
        %1021 = vmatpush.msra.mxu0 0.0
        %1022 = vmatpush.msra.mxu0 %v507
        %1023 = vmatpush.msra.mxu0 %v506
        %1024 = vmatmul.f32.gmra.mxu0 %v1006
        %v1025 = vpop.f32.mrf.mxu0
        %v1026 = vadd.f32 0.0, %v1025
        %1027 = vdwg.mxu0
        %v1028 = vadd.f32 %v1004, %v1026
        %v1029 = vxor.u32 %v1028, 2147483648
        %v1030 = vmul.f32 %v1029, 1.442695
        %v1031 = vpow.pop %v1030
        %v1032 = vadd.f32 %v1031, 1.0
        %v1033 = vrcp.pop %v1032
        %v1034 = vmul.f32 %v1032, %v1033
        %v1035 = vsub.f32 1.0, %v1034
        %v1036 = vmul.f32 %v1033, %v1035
        %v1037 = vadd.f32 %v1033, %v1036
        %vm1038 = vweird.f32 %v1032
        %vm1039 = vweird.f32 %v1033
        %vm1040 = vmor %vm1038, %vm1039
        %v1041 = vsel %vm1040, %v1033, %v1037
        %v1042 = vand.u32 2147483647, %v1032
        %vm1043 = vcmp.eq.f32.partialorder %v1042, 8.507059e+37
        %v1044 = vand.u32 %v1032, 2147483648
        %v1045 = vor.u32 1.1754944e-38, %v1044
        %v1046 = vsel %vm1043, %v1045, %v1041
        %v1047 = vmul.f32 1.0, %v1046
        %s1048 = scalar_lea.vmem [#allocation3], 24
        %v1049 = vld [vmem:[%s1048] sm:$0xff]
        %1050 = vmatpush.msra.mxu0 0.0
        %1051 = vmatpush.msra.mxu0 0.0
        %1052 = vmatpush.msra.mxu0 0.0
        %1053 = vmatpush.msra.mxu0 0.0
        %1054 = vmatpush.msra.mxu0 0.0
        %1055 = vmatpush.msra.mxu0 0.0
        %1056 = vmatpush.msra.mxu0 0.0
        %1057 = vmatpush.msra.mxu0 0.0
        %1058 = vmatpush.msra.mxu0 0.0
        %1059 = vmatpush.msra.mxu0 0.0
        %1060 = vmatpush.msra.mxu0 0.0
        %1061 = vmatpush.msra.mxu0 0.0
        %1062 = vmatpush.msra.mxu0 0.0
        %1063 = vmatpush.msra.mxu0 0.0
        %1064 = vmatpush.msra.mxu0 %v558
        %1065 = vmatpush.msra.mxu0 %v556
        %1066 = vmatmul.f32.gmra.mxu0 %v1006
        %v1067 = vpop.f32.mrf.mxu0
        %v1068 = vadd.f32 0.0, %v1067
        %1069 = vdwg.mxu0
        %v1070 = vadd.f32 %v1049, %v1068
        %v1071 = vxor.u32 %v1070, 2147483648
        %v1072 = vmul.f32 %v1071, 1.442695
        %v1073 = vpow.pop %v1072
        %v1074 = vadd.f32 %v1073, 1.0
        %v1075 = vrcp.pop %v1074
        %v1076 = vmul.f32 %v1074, %v1075
        %v1077 = vsub.f32 1.0, %v1076
        %v1078 = vmul.f32 %v1075, %v1077
        %v1079 = vadd.f32 %v1075, %v1078
        %vm1080 = vweird.f32 %v1074
        %vm1081 = vweird.f32 %v1075
        %vm1082 = vmor %vm1080, %vm1081
        %v1083 = vsel %vm1082, %v1075, %v1079
        %v1084 = vand.u32 2147483647, %v1074
        %vm1085 = vcmp.eq.f32.partialorder %v1084, 8.507059e+37
        %v1086 = vand.u32 %v1074, 2147483648
        %v1087 = vor.u32 1.1754944e-38, %v1086
        %v1088 = vsel %vm1085, %v1087, %v1083
        %v1089 = vmul.f32 1.0, %v1088
        %s1090 = scalar_lea.vmem [#allocation4], 24
        %v1091 = vld [vmem:[%s1090] sm:$0xff]
        %1092 = vmatpush.msra.mxu0 0.0
        %1093 = vmatpush.msra.mxu0 0.0
        %1094 = vmatpush.msra.mxu0 0.0
        %1095 = vmatpush.msra.mxu0 0.0
        %1096 = vmatpush.msra.mxu0 0.0
        %1097 = vmatpush.msra.mxu0 0.0
        %1098 = vmatpush.msra.mxu0 0.0
        %1099 = vmatpush.msra.mxu0 0.0
        %1100 = vmatpush.msra.mxu0 0.0
        %1101 = vmatpush.msra.mxu0 0.0
        %1102 = vmatpush.msra.mxu0 0.0
        %1103 = vmatpush.msra.mxu0 0.0
        %1104 = vmatpush.msra.mxu0 0.0
        %1105 = vmatpush.msra.mxu0 0.0
        %1106 = vmatpush.msra.mxu0 %v605
        %1107 = vmatpush.msra.mxu0 %v603
        %1108 = vmatmul.f32.gmra.mxu0 %v1006
        %v1109 = vpop.f32.mrf.mxu0
        %v1110 = vadd.f32 0.0, %v1109
        %1111 = vdwg.mxu0
        %v1112 = vadd.f32 %v1091, %v1110
        %v1113 = vtanh.pop %v1112
        %s1114 = scalar_lea.vmem [#allocation5], 24
        %v1115 = vld [vmem:[%s1114] sm:$0xff]
        %1116 = vmatpush.msra.mxu0 0.0
        %1117 = vmatpush.msra.mxu0 0.0
        %1118 = vmatpush.msra.mxu0 0.0
        %1119 = vmatpush.msra.mxu0 0.0
        %1120 = vmatpush.msra.mxu0 0.0
        %1121 = vmatpush.msra.mxu0 0.0
        %1122 = vmatpush.msra.mxu0 0.0
        %1123 = vmatpush.msra.mxu0 0.0
        %1124 = vmatpush.msra.mxu0 0.0
        %1125 = vmatpush.msra.mxu0 0.0
        %1126 = vmatpush.msra.mxu0 0.0
        %1127 = vmatpush.msra.mxu0 0.0
        %1128 = vmatpush.msra.mxu0 0.0
        %1129 = vmatpush.msra.mxu0 0.0
        %1130 = vmatpush.msra.mxu0 %v634
        %1131 = vmatpush.msra.mxu0 %v632
        %1132 = vmatmul.f32.gmra.mxu0 %v1006
        %v1133 = vpop.f32.mrf.mxu0
        %v1134 = vadd.f32 0.0, %v1133
        %1135 = vdwg.mxu0
        %v1136 = vadd.f32 %v1115, %v1134
        %v1137 = vxor.u32 %v1136, 2147483648
        %v1138 = vmul.f32 %v1137, 1.442695
        %v1139 = vpow.pop %v1138
        %v1140 = vadd.f32 %v1139, 1.0
        %v1141 = vrcp.pop %v1140
        %v1142 = vmul.f32 %v1140, %v1141
        %v1143 = vsub.f32 1.0, %v1142
        %v1144 = vmul.f32 %v1141, %v1143
        %v1145 = vadd.f32 %v1141, %v1144
        %vm1146 = vweird.f32 %v1140
        %vm1147 = vweird.f32 %v1141
        %vm1148 = vmor %vm1146, %vm1147
        %v1149 = vsel %vm1148, %v1141, %v1145
        %v1150 = vand.u32 2147483647, %v1140
        %vm1151 = vcmp.eq.f32.partialorder %v1150, 8.507059e+37
        %v1152 = vand.u32 %v1140, 2147483648
        %v1153 = vor.u32 1.1754944e-38, %v1152
        %v1154 = vsel %vm1151, %v1153, %v1149
        %v1155 = vmul.f32 1.0, %v1154
        %v1156 = vmul.f32 %v1089, %v998
        %v1157 = vmul.f32 %v1047, %v1113
        %v1158 = vadd.f32 %v1156, %v1157
        %v1159 = vtanh.pop %v1158
        %v1160 = vmul.f32 %v1155, %v1159
        %s1161 = scalar_lea.vmem [#allocation6], 24
        %1162 = vst.msk [vmem:[%s1161] sm:$0xff] %vm393, %v1160
        %s1163 = scalar_lea.vmem [#allocation2], 32
        %v1164 = vld [vmem:[%s1163] sm:$0xff]
        %v1166 = vsel %vm393, %v1160, 0
        %1168 = vmatpush.msra.mxu0 0.0
        %1169 = vmatpush.msra.mxu0 0.0
        %1170 = vmatpush.msra.mxu0 0.0
        %1171 = vmatpush.msra.mxu0 0.0
        %1172 = vmatpush.msra.mxu0 0.0
        %1173 = vmatpush.msra.mxu0 0.0
        %1174 = vmatpush.msra.mxu0 0.0
        %1175 = vmatpush.msra.mxu0 0.0
        %1176 = vmatpush.msra.mxu0 0.0
        %1177 = vmatpush.msra.mxu0 0.0
        %1178 = vmatpush.msra.mxu0 0.0
        %1179 = vmatpush.msra.mxu0 0.0
        %1180 = vmatpush.msra.mxu0 0.0
        %1181 = vmatpush.msra.mxu0 0.0
        %1182 = vmatpush.msra.mxu0 %v507
        %1183 = vmatpush.msra.mxu0 %v506
        %1184 = vmatmul.f32.gmra.mxu0 %v1166
        %v1185 = vpop.f32.mrf.mxu0
        %v1186 = vadd.f32 0.0, %v1185
        %1187 = vdwg.mxu0
        %v1188 = vadd.f32 %v1164, %v1186
        %v1189 = vxor.u32 %v1188, 2147483648
        %v1190 = vmul.f32 %v1189, 1.442695
        %v1191 = vpow.pop %v1190
        %v1192 = vadd.f32 %v1191, 1.0
        %v1193 = vrcp.pop %v1192
        %v1194 = vmul.f32 %v1192, %v1193
        %v1195 = vsub.f32 1.0, %v1194
        %v1196 = vmul.f32 %v1193, %v1195
        %v1197 = vadd.f32 %v1193, %v1196
        %vm1198 = vweird.f32 %v1192
        %vm1199 = vweird.f32 %v1193
        %vm1200 = vmor %vm1198, %vm1199
        %v1201 = vsel %vm1200, %v1193, %v1197
        %v1202 = vand.u32 2147483647, %v1192
        %vm1203 = vcmp.eq.f32.partialorder %v1202, 8.507059e+37
        %v1204 = vand.u32 %v1192, 2147483648
        %v1205 = vor.u32 1.1754944e-38, %v1204
        %v1206 = vsel %vm1203, %v1205, %v1201
        %v1207 = vmul.f32 1.0, %v1206
        %s1208 = scalar_lea.vmem [#allocation3], 32
        %v1209 = vld [vmem:[%s1208] sm:$0xff]
        %1210 = vmatpush.msra.mxu0 0.0
        %1211 = vmatpush.msra.mxu0 0.0
        %1212 = vmatpush.msra.mxu0 0.0
        %1213 = vmatpush.msra.mxu0 0.0
        %1214 = vmatpush.msra.mxu0 0.0
        %1215 = vmatpush.msra.mxu0 0.0
        %1216 = vmatpush.msra.mxu0 0.0
        %1217 = vmatpush.msra.mxu0 0.0
        %1218 = vmatpush.msra.mxu0 0.0
        %1219 = vmatpush.msra.mxu0 0.0
        %1220 = vmatpush.msra.mxu0 0.0
        %1221 = vmatpush.msra.mxu0 0.0
        %1222 = vmatpush.msra.mxu0 0.0
        %1223 = vmatpush.msra.mxu0 0.0
        %1224 = vmatpush.msra.mxu0 %v558
        %1225 = vmatpush.msra.mxu0 %v556
        %1226 = vmatmul.f32.gmra.mxu0 %v1166
        %v1227 = vpop.f32.mrf.mxu0
        %v1228 = vadd.f32 0.0, %v1227
        %1229 = vdwg.mxu0
        %v1230 = vadd.f32 %v1209, %v1228
        %v1231 = vxor.u32 %v1230, 2147483648
        %v1232 = vmul.f32 %v1231, 1.442695
        %v1233 = vpow.pop %v1232
        %v1234 = vadd.f32 %v1233, 1.0
        %v1235 = vrcp.pop %v1234
        %v1236 = vmul.f32 %v1234, %v1235
        %v1237 = vsub.f32 1.0, %v1236
        %v1238 = vmul.f32 %v1235, %v1237
        %v1239 = vadd.f32 %v1235, %v1238
        %vm1240 = vweird.f32 %v1234
        %vm1241 = vweird.f32 %v1235
        %vm1242 = vmor %vm1240, %vm1241
        %v1243 = vsel %vm1242, %v1235, %v1239
        %v1244 = vand.u32 2147483647, %v1234
        %vm1245 = vcmp.eq.f32.partialorder %v1244, 8.507059e+37
        %v1246 = vand.u32 %v1234, 2147483648
        %v1247 = vor.u32 1.1754944e-38, %v1246
        %v1248 = vsel %vm1245, %v1247, %v1243
        %v1249 = vmul.f32 1.0, %v1248
        %s1250 = scalar_lea.vmem [#allocation4], 32
        %v1251 = vld [vmem:[%s1250] sm:$0xff]
        %1252 = vmatpush.msra.mxu0 0.0
        %1253 = vmatpush.msra.mxu0 0.0
        %1254 = vmatpush.msra.mxu0 0.0
        %1255 = vmatpush.msra.mxu0 0.0
        %1256 = vmatpush.msra.mxu0 0.0
        %1257 = vmatpush.msra.mxu0 0.0
        %1258 = vmatpush.msra.mxu0 0.0
        %1259 = vmatpush.msra.mxu0 0.0
        %1260 = vmatpush.msra.mxu0 0.0
        %1261 = vmatpush.msra.mxu0 0.0
        %1262 = vmatpush.msra.mxu0 0.0
        %1263 = vmatpush.msra.mxu0 0.0
        %1264 = vmatpush.msra.mxu0 0.0
        %1265 = vmatpush.msra.mxu0 0.0
        %1266 = vmatpush.msra.mxu0 %v605
        %1267 = vmatpush.msra.mxu0 %v603
        %1268 = vmatmul.f32.gmra.mxu0 %v1166
        %v1269 = vpop.f32.mrf.mxu0
        %v1270 = vadd.f32 0.0, %v1269
        %1271 = vdwg.mxu0
        %v1272 = vadd.f32 %v1251, %v1270
        %v1273 = vtanh.pop %v1272
        %s1274 = scalar_lea.vmem [#allocation5], 32
        %v1275 = vld [vmem:[%s1274] sm:$0xff]
        %1276 = vmatpush.msra.mxu0 0.0
        %1277 = vmatpush.msra.mxu0 0.0
        %1278 = vmatpush.msra.mxu0 0.0
        %1279 = vmatpush.msra.mxu0 0.0
        %1280 = vmatpush.msra.mxu0 0.0
        %1281 = vmatpush.msra.mxu0 0.0
        %1282 = vmatpush.msra.mxu0 0.0
        %1283 = vmatpush.msra.mxu0 0.0
        %1284 = vmatpush.msra.mxu0 0.0
        %1285 = vmatpush.msra.mxu0 0.0
        %1286 = vmatpush.msra.mxu0 0.0
        %1287 = vmatpush.msra.mxu0 0.0
        %1288 = vmatpush.msra.mxu0 0.0
        %1289 = vmatpush.msra.mxu0 0.0
        %1290 = vmatpush.msra.mxu0 %v634
        %1291 = vmatpush.msra.mxu0 %v632
        %1292 = vmatmul.f32.gmra.mxu0 %v1166
        %v1293 = vpop.f32.mrf.mxu0
        %v1294 = vadd.f32 0.0, %v1293
        %1295 = vdwg.mxu0
        %v1296 = vadd.f32 %v1275, %v1294
        %v1297 = vxor.u32 %v1296, 2147483648
        %v1298 = vmul.f32 %v1297, 1.442695
        %v1299 = vpow.pop %v1298
        %v1300 = vadd.f32 %v1299, 1.0
        %v1301 = vrcp.pop %v1300
        %v1302 = vmul.f32 %v1300, %v1301
        %v1303 = vsub.f32 1.0, %v1302
        %v1304 = vmul.f32 %v1301, %v1303
        %v1305 = vadd.f32 %v1301, %v1304
        %vm1306 = vweird.f32 %v1300
        %vm1307 = vweird.f32 %v1301
        %vm1308 = vmor %vm1306, %vm1307
        %v1309 = vsel %vm1308, %v1301, %v1305
        %v1310 = vand.u32 2147483647, %v1300
        %vm1311 = vcmp.eq.f32.partialorder %v1310, 8.507059e+37
        %v1312 = vand.u32 %v1300, 2147483648
        %v1313 = vor.u32 1.1754944e-38, %v1312
        %v1314 = vsel %vm1311, %v1313, %v1309
        %v1315 = vmul.f32 1.0, %v1314
        %v1316 = vmul.f32 %v1249, %v1158
        %v1317 = vmul.f32 %v1207, %v1273
        %v1318 = vadd.f32 %v1316, %v1317
        %v1319 = vtanh.pop %v1318
        %v1320 = vmul.f32 %v1315, %v1319
        %s1321 = scalar_lea.vmem [#allocation6], 32
        %1322 = vst.msk [vmem:[%s1321] sm:$0xff] %vm393, %v1320
        %s1323 = scalar_lea.vmem [#allocation2], 40
        %v1324 = vld [vmem:[%s1323] sm:$0xff]
        %v1326 = vsel %vm393, %v1320, 0
        %1328 = vmatpush.msra.mxu0 0.0
        %1329 = vmatpush.msra.mxu0 0.0
        %1330 = vmatpush.msra.mxu0 0.0
        %1331 = vmatpush.msra.mxu0 0.0
        %1332 = vmatpush.msra.mxu0 0.0
        %1333 = vmatpush.msra.mxu0 0.0
        %1334 = vmatpush.msra.mxu0 0.0
        %1335 = vmatpush.msra.mxu0 0.0
        %1336 = vmatpush.msra.mxu0 0.0
        %1337 = vmatpush.msra.mxu0 0.0
        %1338 = vmatpush.msra.mxu0 0.0
        %1339 = vmatpush.msra.mxu0 0.0
        %1340 = vmatpush.msra.mxu0 0.0
        %1341 = vmatpush.msra.mxu0 0.0
        %1342 = vmatpush.msra.mxu0 %v507
        %1343 = vmatpush.msra.mxu0 %v506
        %1344 = vmatmul.f32.gmra.mxu0 %v1326
        %v1345 = vpop.f32.mrf.mxu0
        %v1346 = vadd.f32 0.0, %v1345
        %1347 = vdwg.mxu0
        %v1348 = vadd.f32 %v1324, %v1346
        %v1349 = vxor.u32 %v1348, 2147483648
        %v1350 = vmul.f32 %v1349, 1.442695
        %v1351 = vpow.pop %v1350
        %v1352 = vadd.f32 %v1351, 1.0
        %v1353 = vrcp.pop %v1352
        %v1354 = vmul.f32 %v1352, %v1353
        %v1355 = vsub.f32 1.0, %v1354
        %v1356 = vmul.f32 %v1353, %v1355
        %v1357 = vadd.f32 %v1353, %v1356
        %vm1358 = vweird.f32 %v1352
        %vm1359 = vweird.f32 %v1353
        %vm1360 = vmor %vm1358, %vm1359
        %v1361 = vsel %vm1360, %v1353, %v1357
        %v1362 = vand.u32 2147483647, %v1352
        %vm1363 = vcmp.eq.f32.partialorder %v1362, 8.507059e+37
        %v1364 = vand.u32 %v1352, 2147483648
        %v1365 = vor.u32 1.1754944e-38, %v1364
        %v1366 = vsel %vm1363, %v1365, %v1361
        %v1367 = vmul.f32 1.0, %v1366
        %s1368 = scalar_lea.vmem [#allocation3], 40
        %v1369 = vld [vmem:[%s1368] sm:$0xff]
        %1370 = vmatpush.msra.mxu0 0.0
        %1371 = vmatpush.msra.mxu0 0.0
        %1372 = vmatpush.msra.mxu0 0.0
        %1373 = vmatpush.msra.mxu0 0.0
        %1374 = vmatpush.msra.mxu0 0.0
        %1375 = vmatpush.msra.mxu0 0.0
        %1376 = vmatpush.msra.mxu0 0.0
        %1377 = vmatpush.msra.mxu0 0.0
        %1378 = vmatpush.msra.mxu0 0.0
        %1379 = vmatpush.msra.mxu0 0.0
        %1380 = vmatpush.msra.mxu0 0.0
        %1381 = vmatpush.msra.mxu0 0.0
        %1382 = vmatpush.msra.mxu0 0.0
        %1383 = vmatpush.msra.mxu0 0.0
        %1384 = vmatpush.msra.mxu0 %v558
        %1385 = vmatpush.msra.mxu0 %v556
        %1386 = vmatmul.f32.gmra.mxu0 %v1326
        %v1387 = vpop.f32.mrf.mxu0
        %v1388 = vadd.f32 0.0, %v1387
        %1389 = vdwg.mxu0
        %v1390 = vadd.f32 %v1369, %v1388
        %v1391 = vxor.u32 %v1390, 2147483648
        %v1392 = vmul.f32 %v1391, 1.442695
        %v1393 = vpow.pop %v1392
        %v1394 = vadd.f32 %v1393, 1.0
        %v1395 = vrcp.pop %v1394
        %v1396 = vmul.f32 %v1394, %v1395
        %v1397 = vsub.f32 1.0, %v1396
        %v1398 = vmul.f32 %v1395, %v1397
        %v1399 = vadd.f32 %v1395, %v1398
        %vm1400 = vweird.f32 %v1394
        %vm1401 = vweird.f32 %v1395
        %vm1402 = vmor %vm1400, %vm1401
        %v1403 = vsel %vm1402, %v1395, %v1399
        %v1404 = vand.u32 2147483647, %v1394
        %vm1405 = vcmp.eq.f32.partialorder %v1404, 8.507059e+37
        %v1406 = vand.u32 %v1394, 2147483648
        %v1407 = vor.u32 1.1754944e-38, %v1406
        %v1408 = vsel %vm1405, %v1407, %v1403
        %v1409 = vmul.f32 1.0, %v1408
        %s1410 = scalar_lea.vmem [#allocation4], 40
        %v1411 = vld [vmem:[%s1410] sm:$0xff]
        %1412 = vmatpush.msra.mxu0 0.0
        %1413 = vmatpush.msra.mxu0 0.0
        %1414 = vmatpush.msra.mxu0 0.0
        %1415 = vmatpush.msra.mxu0 0.0
        %1416 = vmatpush.msra.mxu0 0.0
        %1417 = vmatpush.msra.mxu0 0.0
        %1418 = vmatpush.msra.mxu0 0.0
        %1419 = vmatpush.msra.mxu0 0.0
        %1420 = vmatpush.msra.mxu0 0.0
        %1421 = vmatpush.msra.mxu0 0.0
        %1422 = vmatpush.msra.mxu0 0.0
        %1423 = vmatpush.msra.mxu0 0.0
        %1424 = vmatpush.msra.mxu0 0.0
        %1425 = vmatpush.msra.mxu0 0.0
        %1426 = vmatpush.msra.mxu0 %v605
        %1427 = vmatpush.msra.mxu0 %v603
        %1428 = vmatmul.f32.gmra.mxu0 %v1326
        %v1429 = vpop.f32.mrf.mxu0
        %v1430 = vadd.f32 0.0, %v1429
        %1431 = vdwg.mxu0
        %v1432 = vadd.f32 %v1411, %v1430
        %v1433 = vtanh.pop %v1432
        %s1434 = scalar_lea.vmem [#allocation5], 40
        %v1435 = vld [vmem:[%s1434] sm:$0xff]
        %1436 = vmatpush.msra.mxu0 0.0
        %1437 = vmatpush.msra.mxu0 0.0
        %1438 = vmatpush.msra.mxu0 0.0
        %1439 = vmatpush.msra.mxu0 0.0
        %1440 = vmatpush.msra.mxu0 0.0
        %1441 = vmatpush.msra.mxu0 0.0
        %1442 = vmatpush.msra.mxu0 0.0
        %1443 = vmatpush.msra.mxu0 0.0
        %1444 = vmatpush.msra.mxu0 0.0
        %1445 = vmatpush.msra.mxu0 0.0
        %1446 = vmatpush.msra.mxu0 0.0
        %1447 = vmatpush.msra.mxu0 0.0
        %1448 = vmatpush.msra.mxu0 0.0
        %1449 = vmatpush.msra.mxu0 0.0
        %1450 = vmatpush.msra.mxu0 %v634
        %1451 = vmatpush.msra.mxu0 %v632
        %1452 = vmatmul.f32.gmra.mxu0 %v1326
        %v1453 = vpop.f32.mrf.mxu0
        %v1454 = vadd.f32 0.0, %v1453
        %1455 = vdwg.mxu0
        %v1456 = vadd.f32 %v1435, %v1454
        %v1457 = vxor.u32 %v1456, 2147483648
        %v1458 = vmul.f32 %v1457, 1.442695
        %v1459 = vpow.pop %v1458
        %v1460 = vadd.f32 %v1459, 1.0
        %v1461 = vrcp.pop %v1460
        %v1462 = vmul.f32 %v1460, %v1461
        %v1463 = vsub.f32 1.0, %v1462
        %v1464 = vmul.f32 %v1461, %v1463
        %v1465 = vadd.f32 %v1461, %v1464
        %vm1466 = vweird.f32 %v1460
        %vm1467 = vweird.f32 %v1461
        %vm1468 = vmor %vm1466, %vm1467
        %v1469 = vsel %vm1468, %v1461, %v1465
        %v1470 = vand.u32 2147483647, %v1460
        %vm1471 = vcmp.eq.f32.partialorder %v1470, 8.507059e+37
        %v1472 = vand.u32 %v1460, 2147483648
        %v1473 = vor.u32 1.1754944e-38, %v1472
        %v1474 = vsel %vm1471, %v1473, %v1469
        %v1475 = vmul.f32 1.0, %v1474
        %v1476 = vmul.f32 %v1409, %v1318
        %v1477 = vmul.f32 %v1367, %v1433
        %v1478 = vadd.f32 %v1476, %v1477
        %v1479 = vtanh.pop %v1478
        %v1480 = vmul.f32 %v1475, %v1479
        %s1481 = scalar_lea.vmem [#allocation6], 40
        %1482 = vst.msk [vmem:[%s1481] sm:$0xff] %vm393, %v1480
        %s1483 = scalar_lea.vmem [#allocation2], 48
        %v1484 = vld [vmem:[%s1483] sm:$0xff]
        %v1486 = vsel %vm393, %v1480, 0
        %1488 = vmatpush.msra.mxu0 0.0
        %1489 = vmatpush.msra.mxu0 0.0
        %1490 = vmatpush.msra.mxu0 0.0
        %1491 = vmatpush.msra.mxu0 0.0
        %1492 = vmatpush.msra.mxu0 0.0
        %1493 = vmatpush.msra.mxu0 0.0
        %1494 = vmatpush.msra.mxu0 0.0
        %1495 = vmatpush.msra.mxu0 0.0
        %1496 = vmatpush.msra.mxu0 0.0
        %1497 = vmatpush.msra.mxu0 0.0
        %1498 = vmatpush.msra.mxu0 0.0
        %1499 = vmatpush.msra.mxu0 0.0
        %1500 = vmatpush.msra.mxu0 0.0
        %1501 = vmatpush.msra.mxu0 0.0
        %1502 = vmatpush.msra.mxu0 %v507
        %1503 = vmatpush.msra.mxu0 %v506
        %1504 = vmatmul.f32.gmra.mxu0 %v1486
        %v1505 = vpop.f32.mrf.mxu0
        %v1506 = vadd.f32 0.0, %v1505
        %1507 = vdwg.mxu0
        %v1508 = vadd.f32 %v1484, %v1506
        %v1509 = vxor.u32 %v1508, 2147483648
        %v1510 = vmul.f32 %v1509, 1.442695
        %v1511 = vpow.pop %v1510
        %v1512 = vadd.f32 %v1511, 1.0
        %v1513 = vrcp.pop %v1512
        %v1514 = vmul.f32 %v1512, %v1513
        %v1515 = vsub.f32 1.0, %v1514
        %v1516 = vmul.f32 %v1513, %v1515
        %v1517 = vadd.f32 %v1513, %v1516
        %vm1518 = vweird.f32 %v1512
        %vm1519 = vweird.f32 %v1513
        %vm1520 = vmor %vm1518, %vm1519
        %v1521 = vsel %vm1520, %v1513, %v1517
        %v1522 = vand.u32 2147483647, %v1512
        %vm1523 = vcmp.eq.f32.partialorder %v1522, 8.507059e+37
        %v1524 = vand.u32 %v1512, 2147483648
        %v1525 = vor.u32 1.1754944e-38, %v1524
        %v1526 = vsel %vm1523, %v1525, %v1521
        %v1527 = vmul.f32 1.0, %v1526
        %s1528 = scalar_lea.vmem [#allocation3], 48
        %v1529 = vld [vmem:[%s1528] sm:$0xff]
        %1530 = vmatpush.msra.mxu0 0.0
        %1531 = vmatpush.msra.mxu0 0.0
        %1532 = vmatpush.msra.mxu0 0.0
        %1533 = vmatpush.msra.mxu0 0.0
        %1534 = vmatpush.msra.mxu0 0.0
        %1535 = vmatpush.msra.mxu0 0.0
        %1536 = vmatpush.msra.mxu0 0.0
        %1537 = vmatpush.msra.mxu0 0.0
        %1538 = vmatpush.msra.mxu0 0.0
        %1539 = vmatpush.msra.mxu0 0.0
        %1540 = vmatpush.msra.mxu0 0.0
        %1541 = vmatpush.msra.mxu0 0.0
        %1542 = vmatpush.msra.mxu0 0.0
        %1543 = vmatpush.msra.mxu0 0.0
        %1544 = vmatpush.msra.mxu0 %v558
        %1545 = vmatpush.msra.mxu0 %v556
        %1546 = vmatmul.f32.gmra.mxu0 %v1486
        %v1547 = vpop.f32.mrf.mxu0
        %v1548 = vadd.f32 0.0, %v1547
        %1549 = vdwg.mxu0
        %v1550 = vadd.f32 %v1529, %v1548
        %v1551 = vxor.u32 %v1550, 2147483648
        %v1552 = vmul.f32 %v1551, 1.442695
        %v1553 = vpow.pop %v1552
        %v1554 = vadd.f32 %v1553, 1.0
        %v1555 = vrcp.pop %v1554
        %v1556 = vmul.f32 %v1554, %v1555
        %v1557 = vsub.f32 1.0, %v1556
        %v1558 = vmul.f32 %v1555, %v1557
        %v1559 = vadd.f32 %v1555, %v1558
        %vm1560 = vweird.f32 %v1554
        %vm1561 = vweird.f32 %v1555
        %vm1562 = vmor %vm1560, %vm1561
        %v1563 = vsel %vm1562, %v1555, %v1559
        %v1564 = vand.u32 2147483647, %v1554
        %vm1565 = vcmp.eq.f32.partialorder %v1564, 8.507059e+37
        %v1566 = vand.u32 %v1554, 2147483648
        %v1567 = vor.u32 1.1754944e-38, %v1566
        %v1568 = vsel %vm1565, %v1567, %v1563
        %v1569 = vmul.f32 1.0, %v1568
        %s1570 = scalar_lea.vmem [#allocation4], 48
        %v1571 = vld [vmem:[%s1570] sm:$0xff]
        %1572 = vmatpush.msra.mxu0 0.0
        %1573 = vmatpush.msra.mxu0 0.0
        %1574 = vmatpush.msra.mxu0 0.0
        %1575 = vmatpush.msra.mxu0 0.0
        %1576 = vmatpush.msra.mxu0 0.0
        %1577 = vmatpush.msra.mxu0 0.0
        %1578 = vmatpush.msra.mxu0 0.0
        %1579 = vmatpush.msra.mxu0 0.0
        %1580 = vmatpush.msra.mxu0 0.0
        %1581 = vmatpush.msra.mxu0 0.0
        %1582 = vmatpush.msra.mxu0 0.0
        %1583 = vmatpush.msra.mxu0 0.0
        %1584 = vmatpush.msra.mxu0 0.0
        %1585 = vmatpush.msra.mxu0 0.0
        %1586 = vmatpush.msra.mxu0 %v605
        %1587 = vmatpush.msra.mxu0 %v603
        %1588 = vmatmul.f32.gmra.mxu0 %v1486
        %v1589 = vpop.f32.mrf.mxu0
        %v1590 = vadd.f32 0.0, %v1589
        %1591 = vdwg.mxu0
        %v1592 = vadd.f32 %v1571, %v1590
        %v1593 = vtanh.pop %v1592
        %s1594 = scalar_lea.vmem [#allocation5], 48
        %v1595 = vld [vmem:[%s1594] sm:$0xff]
        %1596 = vmatpush.msra.mxu0 0.0
        %1597 = vmatpush.msra.mxu0 0.0
        %1598 = vmatpush.msra.mxu0 0.0
        %1599 = vmatpush.msra.mxu0 0.0
        %1600 = vmatpush.msra.mxu0 0.0
        %1601 = vmatpush.msra.mxu0 0.0
        %1602 = vmatpush.msra.mxu0 0.0
        %1603 = vmatpush.msra.mxu0 0.0
        %1604 = vmatpush.msra.mxu0 0.0
        %1605 = vmatpush.msra.mxu0 0.0
        %1606 = vmatpush.msra.mxu0 0.0
        %1607 = vmatpush.msra.mxu0 0.0
        %1608 = vmatpush.msra.mxu0 0.0
        %1609 = vmatpush.msra.mxu0 0.0
        %1610 = vmatpush.msra.mxu0 %v634
        %1611 = vmatpush.msra.mxu0 %v632
        %1612 = vmatmul.f32.gmra.mxu0 %v1486
        %v1613 = vpop.f32.mrf.mxu0
        %v1614 = vadd.f32 0.0, %v1613
        %1615 = vdwg.mxu0
        %v1616 = vadd.f32 %v1595, %v1614
        %v1617 = vxor.u32 %v1616, 2147483648
        %v1618 = vmul.f32 %v1617, 1.442695
        %v1619 = vpow.pop %v1618
        %v1620 = vadd.f32 %v1619, 1.0
        %v1621 = vrcp.pop %v1620
        %v1622 = vmul.f32 %v1620, %v1621
        %v1623 = vsub.f32 1.0, %v1622
        %v1624 = vmul.f32 %v1621, %v1623
        %v1625 = vadd.f32 %v1621, %v1624
        %vm1626 = vweird.f32 %v1620
        %vm1627 = vweird.f32 %v1621
        %vm1628 = vmor %vm1626, %vm1627
        %v1629 = vsel %vm1628, %v1621, %v1625
        %v1630 = vand.u32 2147483647, %v1620
        %vm1631 = vcmp.eq.f32.partialorder %v1630, 8.507059e+37
        %v1632 = vand.u32 %v1620, 2147483648
        %v1633 = vor.u32 1.1754944e-38, %v1632
        %v1634 = vsel %vm1631, %v1633, %v1629
        %v1635 = vmul.f32 1.0, %v1634
        %v1636 = vmul.f32 %v1569, %v1478
        %v1637 = vmul.f32 %v1527, %v1593
        %v1638 = vadd.f32 %v1636, %v1637
        %v1639 = vtanh.pop %v1638
        %v1640 = vmul.f32 %v1635, %v1639
        %s1641 = scalar_lea.vmem [#allocation6], 48
        %1642 = vst.msk [vmem:[%s1641] sm:$0xff] %vm393, %v1640
        %s1643 = scalar_lea.vmem [#allocation2], 56
        %v1644 = vld [vmem:[%s1643] sm:$0xff]
        %v1646 = vsel %vm393, %v1640, 0
        %1648 = vmatpush.msra.mxu0 0.0
        %1649 = vmatpush.msra.mxu0 0.0
        %1650 = vmatpush.msra.mxu0 0.0
        %1651 = vmatpush.msra.mxu0 0.0
        %1652 = vmatpush.msra.mxu0 0.0
        %1653 = vmatpush.msra.mxu0 0.0
        %1654 = vmatpush.msra.mxu0 0.0
        %1655 = vmatpush.msra.mxu0 0.0
        %1656 = vmatpush.msra.mxu0 0.0
        %1657 = vmatpush.msra.mxu0 0.0
        %1658 = vmatpush.msra.mxu0 0.0
        %1659 = vmatpush.msra.mxu0 0.0
        %1660 = vmatpush.msra.mxu0 0.0
        %1661 = vmatpush.msra.mxu0 0.0
        %1662 = vmatpush.msra.mxu0 %v507
        %1663 = vmatpush.msra.mxu0 %v506
        %1664 = vmatmul.f32.gmra.mxu0 %v1646
        %v1665 = vpop.f32.mrf.mxu0
        %v1666 = vadd.f32 0.0, %v1665
        %1667 = vdwg.mxu0
        %v1668 = vadd.f32 %v1644, %v1666
        %v1669 = vxor.u32 %v1668, 2147483648
        %v1670 = vmul.f32 %v1669, 1.442695
        %v1671 = vpow.pop %v1670
        %v1672 = vadd.f32 %v1671, 1.0
        %v1673 = vrcp.pop %v1672
        %v1674 = vmul.f32 %v1672, %v1673
        %v1675 = vsub.f32 1.0, %v1674
        %v1676 = vmul.f32 %v1673, %v1675
        %v1677 = vadd.f32 %v1673, %v1676
        %vm1678 = vweird.f32 %v1672
        %vm1679 = vweird.f32 %v1673
        %vm1680 = vmor %vm1678, %vm1679
        %v1681 = vsel %vm1680, %v1673, %v1677
        %v1682 = vand.u32 2147483647, %v1672
        %vm1683 = vcmp.eq.f32.partialorder %v1682, 8.507059e+37
        %v1684 = vand.u32 %v1672, 2147483648
        %v1685 = vor.u32 1.1754944e-38, %v1684
        %v1686 = vsel %vm1683, %v1685, %v1681
        %v1687 = vmul.f32 1.0, %v1686
        %s1688 = scalar_lea.vmem [#allocation3], 56
        %v1689 = vld [vmem:[%s1688] sm:$0xff]
        %1690 = vmatpush.msra.mxu0 0.0
        %1691 = vmatpush.msra.mxu0 0.0
        %1692 = vmatpush.msra.mxu0 0.0
        %1693 = vmatpush.msra.mxu0 0.0
        %1694 = vmatpush.msra.mxu0 0.0
        %1695 = vmatpush.msra.mxu0 0.0
        %1696 = vmatpush.msra.mxu0 0.0
        %1697 = vmatpush.msra.mxu0 0.0
        %1698 = vmatpush.msra.mxu0 0.0
        %1699 = vmatpush.msra.mxu0 0.0
        %1700 = vmatpush.msra.mxu0 0.0
        %1701 = vmatpush.msra.mxu0 0.0
        %1702 = vmatpush.msra.mxu0 0.0
        %1703 = vmatpush.msra.mxu0 0.0
        %1704 = vmatpush.msra.mxu0 %v558
        %1705 = vmatpush.msra.mxu0 %v556
        %1706 = vmatmul.f32.gmra.mxu0 %v1646
        %v1707 = vpop.f32.mrf.mxu0
        %v1708 = vadd.f32 0.0, %v1707
        %1709 = vdwg.mxu0
        %v1710 = vadd.f32 %v1689, %v1708
        %v1711 = vxor.u32 %v1710, 2147483648
        %v1712 = vmul.f32 %v1711, 1.442695
        %v1713 = vpow.pop %v1712
        %v1714 = vadd.f32 %v1713, 1.0
        %v1715 = vrcp.pop %v1714
        %v1716 = vmul.f32 %v1714, %v1715
        %v1717 = vsub.f32 1.0, %v1716
        %v1718 = vmul.f32 %v1715, %v1717
        %v1719 = vadd.f32 %v1715, %v1718
        %vm1720 = vweird.f32 %v1714
        %vm1721 = vweird.f32 %v1715
        %vm1722 = vmor %vm1720, %vm1721
        %v1723 = vsel %vm1722, %v1715, %v1719
        %v1724 = vand.u32 2147483647, %v1714
        %vm1725 = vcmp.eq.f32.partialorder %v1724, 8.507059e+37
        %v1726 = vand.u32 %v1714, 2147483648
        %v1727 = vor.u32 1.1754944e-38, %v1726
        %v1728 = vsel %vm1725, %v1727, %v1723
        %v1729 = vmul.f32 1.0, %v1728
        %s1730 = scalar_lea.vmem [#allocation4], 56
        %v1731 = vld [vmem:[%s1730] sm:$0xff]
        %1732 = vmatpush.msra.mxu0 0.0
        %1733 = vmatpush.msra.mxu0 0.0
        %1734 = vmatpush.msra.mxu0 0.0
        %1735 = vmatpush.msra.mxu0 0.0
        %1736 = vmatpush.msra.mxu0 0.0
        %1737 = vmatpush.msra.mxu0 0.0
        %1738 = vmatpush.msra.mxu0 0.0
        %1739 = vmatpush.msra.mxu0 0.0
        %1740 = vmatpush.msra.mxu0 0.0
        %1741 = vmatpush.msra.mxu0 0.0
        %1742 = vmatpush.msra.mxu0 0.0
        %1743 = vmatpush.msra.mxu0 0.0
        %1744 = vmatpush.msra.mxu0 0.0
        %1745 = vmatpush.msra.mxu0 0.0
        %1746 = vmatpush.msra.mxu0 %v605
        %1747 = vmatpush.msra.mxu0 %v603
        %1748 = vmatmul.f32.gmra.mxu0 %v1646
        %v1749 = vpop.f32.mrf.mxu0
        %v1750 = vadd.f32 0.0, %v1749
        %1751 = vdwg.mxu0
        %v1752 = vadd.f32 %v1731, %v1750
        %v1753 = vtanh.pop %v1752
        %s1754 = scalar_lea.vmem [#allocation5], 56
        %v1755 = vld [vmem:[%s1754] sm:$0xff]
        %1756 = vmatpush.msra.mxu0 0.0
        %1757 = vmatpush.msra.mxu0 0.0
        %1758 = vmatpush.msra.mxu0 0.0
        %1759 = vmatpush.msra.mxu0 0.0
        %1760 = vmatpush.msra.mxu0 0.0
        %1761 = vmatpush.msra.mxu0 0.0
        %1762 = vmatpush.msra.mxu0 0.0
        %1763 = vmatpush.msra.mxu0 0.0
        %1764 = vmatpush.msra.mxu0 0.0
        %1765 = vmatpush.msra.mxu0 0.0
        %1766 = vmatpush.msra.mxu0 0.0
        %1767 = vmatpush.msra.mxu0 0.0
        %1768 = vmatpush.msra.mxu0 0.0
        %1769 = vmatpush.msra.mxu0 0.0
        %1770 = vmatpush.msra.mxu0 %v634
        %1771 = vmatpush.msra.mxu0 %v632
        %1772 = vmatmul.f32.gmra.mxu0 %v1646
        %v1773 = vpop.f32.mrf.mxu0
        %v1774 = vadd.f32 0.0, %v1773
        %1775 = vdwg.mxu0
        %v1776 = vadd.f32 %v1755, %v1774
        %v1777 = vxor.u32 %v1776, 2147483648
        %v1778 = vmul.f32 %v1777, 1.442695
        %v1779 = vpow.pop %v1778
        %v1780 = vadd.f32 %v1779, 1.0
        %v1781 = vrcp.pop %v1780
        %v1782 = vmul.f32 %v1780, %v1781
        %v1783 = vsub.f32 1.0, %v1782
        %v1784 = vmul.f32 %v1781, %v1783
        %v1785 = vadd.f32 %v1781, %v1784
        %vm1786 = vweird.f32 %v1780
        %vm1787 = vweird.f32 %v1781
        %vm1788 = vmor %vm1786, %vm1787
        %v1789 = vsel %vm1788, %v1781, %v1785
        %v1790 = vand.u32 2147483647, %v1780
        %vm1791 = vcmp.eq.f32.partialorder %v1790, 8.507059e+37
        %v1792 = vand.u32 %v1780, 2147483648
        %v1793 = vor.u32 1.1754944e-38, %v1792
        %v1794 = vsel %vm1791, %v1793, %v1789
        %v1795 = vmul.f32 1.0, %v1794
        %v1796 = vmul.f32 %v1729, %v1638
        %v1797 = vmul.f32 %v1687, %v1753
        %v1798 = vadd.f32 %v1796, %v1797
        %v1799 = vtanh.pop %v1798
        %v1800 = vmul.f32 %v1795, %v1799
        %s1801 = scalar_lea.vmem [#allocation6], 56
        %1802 = vst.msk [vmem:[%s1801] sm:$0xff] %vm393, %v1800
        %v1803 = vld [vmem:[#allocation6] sm:$0xff]
        %v1804 = vld [vmem:[#allocation6 + $0x8] sm:$0xff]
        %v1805 = vld [vmem:[#allocation6 + $0x10] sm:$0xff]
        %v1806 = vld [vmem:[#allocation6 + $0x18] sm:$0xff]
        %v1807 = vld [vmem:[#allocation6 + $0x20] sm:$0xff]
        %v1808 = vld [vmem:[#allocation6 + $0x28] sm:$0xff]
        %v1809 = vld [vmem:[#allocation6 + $0x30] sm:$0xff]
        %v1810 = vld [vmem:[#allocation6 + $0x38] sm:$0xff]
        %v1811 = vld [vmem:[%s4] sm:$0xff]
        %v1812 = vld [vmem:[%s4 + $0x8] sm:$0xff]
        %v1813 = vld [vmem:[%s5] sm:$0x1]
        %v1815 = vperm.slane %v1813, 0
        %v1818 = vsel %vm393, %v1803, 0
        %v1821 = vsel %vm393, %v1804, 0
        %v1824 = vsel %vm393, %v1805, 0
        %v1827 = vsel %vm393, %v1806, 0
        %v1830 = vsel %vm393, %v1807, 0
        %v1833 = vsel %vm393, %v1808, 0
        %v1836 = vsel %vm393, %v1809, 0
        %v1839 = vsel %vm393, %v1810, 0
        %1841 = vmatpush.msra.mxu0 0.0
        %1842 = vmatpush.msra.mxu0 0.0
        %1843 = vmatpush.msra.mxu0 0.0
        %1844 = vmatpush.msra.mxu0 0.0
        %1845 = vmatpush.msra.mxu0 0.0
        %1846 = vmatpush.msra.mxu0 0.0
        %1847 = vmatpush.msra.mxu0 0.0
        %1848 = vmatpush.msra.mxu0 0.0
        %1849 = vmatpush.msra.mxu0 0.0
        %1850 = vmatpush.msra.mxu0 0.0
        %1851 = vmatpush.msra.mxu0 0.0
        %1852 = vmatpush.msra.mxu0 0.0
        %1853 = vmatpush.msra.mxu0 0.0
        %1854 = vmatpush.msra.mxu0 0.0
        %1855 = vmatpush.msra.mxu0 %v1812
        %1856 = vmatpush.msra.mxu0 %v1811
        %1857 = vmatmul.f32.gmra.mxu0 %v1818
        %v1858 = vpop.f32.mrf.mxu0
        %v1859 = vadd.f32 %v1815, %v1858
        %1860 = vmatmul.f32.gmra.mxu0 %v1821
        %v1861 = vpop.f32.mrf.mxu0
        %v1862 = vadd.f32 %v1815, %v1861
        %1863 = vmatmul.f32.gmra.mxu0 %v1824
        %v1864 = vpop.f32.mrf.mxu0
        %v1865 = vadd.f32 %v1815, %v1864
        %1866 = vmatmul.f32.gmra.mxu0 %v1827
        %v1867 = vpop.f32.mrf.mxu0
        %v1868 = vadd.f32 %v1815, %v1867
        %1869 = vmatmul.f32.gmra.mxu0 %v1830
        %v1870 = vpop.f32.mrf.mxu0
        %v1871 = vadd.f32 %v1815, %v1870
        %1872 = vmatmul.f32.gmra.mxu0 %v1833
        %v1873 = vpop.f32.mrf.mxu0
        %v1874 = vadd.f32 %v1815, %v1873
        %1875 = vmatmul.f32.gmra.mxu0 %v1836
        %v1876 = vpop.f32.mrf.mxu0
        %v1877 = vadd.f32 %v1815, %v1876
        %1878 = vmatmul.f32.gmra.mxu0 %v1839
        %v1879 = vpop.f32.mrf.mxu0
        %v1880 = vadd.f32 %v1815, %v1879
        %1881 = vdwg.mxu0
        %v1882 = vxor.u32 %v1859, 2147483648
        %v1883 = vxor.u32 %v1862, 2147483648
        %v1884 = vxor.u32 %v1865, 2147483648
        %v1885 = vxor.u32 %v1868, 2147483648
        %v1886 = vxor.u32 %v1871, 2147483648
        %v1887 = vxor.u32 %v1874, 2147483648
        %v1888 = vxor.u32 %v1877, 2147483648
        %v1889 = vxor.u32 %v1880, 2147483648
        %v1890 = vmul.f32 %v1882, 1.442695
        %v1891 = vpow.pop %v1890
        %v1892 = vmul.f32 %v1883, 1.442695
        %v1893 = vpow.pop %v1892
        %v1894 = vmul.f32 %v1884, 1.442695
        %v1895 = vpow.pop %v1894
        %v1896 = vmul.f32 %v1885, 1.442695
        %v1897 = vpow.pop %v1896
        %v1898 = vmul.f32 %v1886, 1.442695
        %v1899 = vpow.pop %v1898
        %v1900 = vmul.f32 %v1887, 1.442695
        %v1901 = vpow.pop %v1900
        %v1902 = vmul.f32 %v1888, 1.442695
        %v1903 = vpow.pop %v1902
        %v1904 = vmul.f32 %v1889, 1.442695
        %v1905 = vpow.pop %v1904
        %v1906 = vadd.f32 %v1891, 1.0
        %v1907 = vadd.f32 %v1893, 1.0
        %v1908 = vadd.f32 %v1895, 1.0
        %v1909 = vadd.f32 %v1897, 1.0
        %v1910 = vadd.f32 %v1899, 1.0
        %v1911 = vadd.f32 %v1901, 1.0
        %v1912 = vadd.f32 %v1903, 1.0
        %v1913 = vadd.f32 %v1905, 1.0
        %v1914 = vrcp.pop %v1906
        %v1915 = vmul.f32 %v1906, %v1914
        %v1916 = vsub.f32 1.0, %v1915
        %v1917 = vmul.f32 %v1914, %v1916
        %v1918 = vadd.f32 %v1914, %v1917
        %vm1919 = vweird.f32 %v1906
        %vm1920 = vweird.f32 %v1914
        %vm1921 = vmor %vm1919, %vm1920
        %v1922 = vsel %vm1921, %v1914, %v1918
        %v1923 = vand.u32 2147483647, %v1906
        %vm1924 = vcmp.eq.f32.partialorder %v1923, 8.507059e+37
        %v1925 = vand.u32 %v1906, 2147483648
        %v1926 = vor.u32 1.1754944e-38, %v1925
        %v1927 = vsel %vm1924, %v1926, %v1922
        %v1928 = vmul.f32 1.0, %v1927
        %v1929 = vrcp.pop %v1907
        %v1930 = vmul.f32 %v1907, %v1929
        %v1931 = vsub.f32 1.0, %v1930
        %v1932 = vmul.f32 %v1929, %v1931
        %v1933 = vadd.f32 %v1929, %v1932
        %vm1934 = vweird.f32 %v1907
        %vm1935 = vweird.f32 %v1929
        %vm1936 = vmor %vm1934, %vm1935
        %v1937 = vsel %vm1936, %v1929, %v1933
        %v1938 = vand.u32 2147483647, %v1907
        %vm1939 = vcmp.eq.f32.partialorder %v1938, 8.507059e+37
        %v1940 = vand.u32 %v1907, 2147483648
        %v1941 = vor.u32 1.1754944e-38, %v1940
        %v1942 = vsel %vm1939, %v1941, %v1937
        %v1943 = vmul.f32 1.0, %v1942
        %v1944 = vrcp.pop %v1908
        %v1945 = vmul.f32 %v1908, %v1944
        %v1946 = vsub.f32 1.0, %v1945
        %v1947 = vmul.f32 %v1944, %v1946
        %v1948 = vadd.f32 %v1944, %v1947
        %vm1949 = vweird.f32 %v1908
        %vm1950 = vweird.f32 %v1944
        %vm1951 = vmor %vm1949, %vm1950
        %v1952 = vsel %vm1951, %v1944, %v1948
        %v1953 = vand.u32 2147483647, %v1908
        %vm1954 = vcmp.eq.f32.partialorder %v1953, 8.507059e+37
        %v1955 = vand.u32 %v1908, 2147483648
        %v1956 = vor.u32 1.1754944e-38, %v1955
        %v1957 = vsel %vm1954, %v1956, %v1952
        %v1958 = vmul.f32 1.0, %v1957
        %v1959 = vrcp.pop %v1909
        %v1960 = vmul.f32 %v1909, %v1959
        %v1961 = vsub.f32 1.0, %v1960
        %v1962 = vmul.f32 %v1959, %v1961
        %v1963 = vadd.f32 %v1959, %v1962
        %vm1964 = vweird.f32 %v1909
        %vm1965 = vweird.f32 %v1959
        %vm1966 = vmor %vm1964, %vm1965
        %v1967 = vsel %vm1966, %v1959, %v1963
        %v1968 = vand.u32 2147483647, %v1909
        %vm1969 = vcmp.eq.f32.partialorder %v1968, 8.507059e+37
        %v1970 = vand.u32 %v1909, 2147483648
        %v1971 = vor.u32 1.1754944e-38, %v1970
        %v1972 = vsel %vm1969, %v1971, %v1967
        %v1973 = vmul.f32 1.0, %v1972
        %v1974 = vrcp.pop %v1910
        %v1975 = vmul.f32 %v1910, %v1974
        %v1976 = vsub.f32 1.0, %v1975
        %v1977 = vmul.f32 %v1974, %v1976
        %v1978 = vadd.f32 %v1974, %v1977
        %vm1979 = vweird.f32 %v1910
        %vm1980 = vweird.f32 %v1974
        %vm1981 = vmor %vm1979, %vm1980
        %v1982 = vsel %vm1981, %v1974, %v1978
        %v1983 = vand.u32 2147483647, %v1910
        %vm1984 = vcmp.eq.f32.partialorder %v1983, 8.507059e+37
        %v1985 = vand.u32 %v1910, 2147483648
        %v1986 = vor.u32 1.1754944e-38, %v1985
        %v1987 = vsel %vm1984, %v1986, %v1982
        %v1988 = vmul.f32 1.0, %v1987
        %v1989 = vrcp.pop %v1911
        %v1990 = vmul.f32 %v1911, %v1989
        %v1991 = vsub.f32 1.0, %v1990
        %v1992 = vmul.f32 %v1989, %v1991
        %v1993 = vadd.f32 %v1989, %v1992
        %vm1994 = vweird.f32 %v1911
        %vm1995 = vweird.f32 %v1989
        %vm1996 = vmor %vm1994, %vm1995
        %v1997 = vsel %vm1996, %v1989, %v1993
        %v1998 = vand.u32 2147483647, %v1911
        %vm1999 = vcmp.eq.f32.partialorder %v1998, 8.507059e+37
        %v2000 = vand.u32 %v1911, 2147483648
        %v2001 = vor.u32 1.1754944e-38, %v2000
        %v2002 = vsel %vm1999, %v2001, %v1997
        %v2003 = vmul.f32 1.0, %v2002
        %v2004 = vrcp.pop %v1912
        %v2005 = vmul.f32 %v1912, %v2004
        %v2006 = vsub.f32 1.0, %v2005
        %v2007 = vmul.f32 %v2004, %v2006
        %v2008 = vadd.f32 %v2004, %v2007
        %vm2009 = vweird.f32 %v1912
        %vm2010 = vweird.f32 %v2004
        %vm2011 = vmor %vm2009, %vm2010
        %v2012 = vsel %vm2011, %v2004, %v2008
        %v2013 = vand.u32 2147483647, %v1912
        %vm2014 = vcmp.eq.f32.partialorder %v2013, 8.507059e+37
        %v2015 = vand.u32 %v1912, 2147483648
        %v2016 = vor.u32 1.1754944e-38, %v2015
        %v2017 = vsel %vm2014, %v2016, %v2012
        %v2018 = vmul.f32 1.0, %v2017
        %v2019 = vrcp.pop %v1913
        %v2020 = vmul.f32 %v1913, %v2019
        %v2021 = vsub.f32 1.0, %v2020
        %v2022 = vmul.f32 %v2019, %v2021
        %v2023 = vadd.f32 %v2019, %v2022
        %vm2024 = vweird.f32 %v1913
        %vm2025 = vweird.f32 %v2019
        %vm2026 = vmor %vm2024, %vm2025
        %v2027 = vsel %vm2026, %v2019, %v2023
        %v2028 = vand.u32 2147483647, %v1913
        %vm2029 = vcmp.eq.f32.partialorder %v2028, 8.507059e+37
        %v2030 = vand.u32 %v1913, 2147483648
        %v2031 = vor.u32 1.1754944e-38, %v2030
        %v2032 = vsel %vm2029, %v2031, %v2027
        %v2033 = vmul.f32 1.0, %v2032
        %v2034 = vmul.f32 %v1928, 80.0
        %v2035 = vmul.f32 %v1943, 80.0
        %v2036 = vmul.f32 %v1958, 80.0
        %v2037 = vmul.f32 %v1973, 80.0
        %v2038 = vmul.f32 %v1988, 80.0
        %v2039 = vmul.f32 %v2003, 80.0
        %v2040 = vmul.f32 %v2018, 80.0
        %v2041 = vmul.f32 %v2033, 80.0
        %v2042 = vadd.f32 %v2034, 0.0
        %v2043 = vadd.f32 %v2035, 0.0
        %v2044 = vadd.f32 %v2036, 0.0
        %v2045 = vadd.f32 %v2037, 0.0
        %v2046 = vadd.f32 %v2038, 0.0
        %v2047 = vadd.f32 %v2039, 0.0
        %v2048 = vadd.f32 %v2040, 0.0
        %v2049 = vadd.f32 %v2041, 0.0
        %2050 = vst.msk [vmem:[%s308] sm:$0xff] %vm323, %v2042
        %2051 = vst.msk [vmem:[%s308 + $0x8] sm:$0xff] %vm323, %v2043
        %2052 = vst.msk [vmem:[%s308 + $0x10] sm:$0xff] %vm323, %v2044
        %2053 = vst.msk [vmem:[%s308 + $0x18] sm:$0xff] %vm323, %v2045
        %2054 = vst.msk [vmem:[%s308 + $0x20] sm:$0xff] %vm323, %v2046
        %2055 = vst.msk [vmem:[%s308 + $0x28] sm:$0xff] %vm323, %v2047
        %2056 = vst.msk [vmem:[%s308 + $0x30] sm:$0xff] %vm323, %v2048
        %2057 = vst.msk [vmem:[%s308 + $0x38] sm:$0xff] %vm323, %v2049
        %s2058 = sand.u32 %s156, 1
        %s2059 = sand.u32 %s156, 1
        %s2060 = smul.addr %s2059, 64
        %s2061 = scalar_lea.vmem [#allocation8], %s2060
        // Predicated region
        $region83: #{tpu_custom_call.1} parent=77 // pred_check
          %p2062 = pneg %p166
        $region84: #{tpu_custom_call.1} parent=77 // pred_check_branch
          %2064 = sbr.rel (%p2062) target = $region86
        $region85: #{tpu_custom_call.1} parent=77 // pred_region
          %s2065 = smul.addr %s17, 8
          %s2066 = scalar_lea.vmem %s6, %s2065
          // Predicated region
          $region87: #{tpu_custom_call.1} parent=85 // pred_check
            _
          $region88: #{tpu_custom_call.1} parent=85 // pred_check_branch
            %2068 = sbr.rel (0) target = $region90
          $region89: #{tpu_custom_call.1} parent=85 // pred_region
            // Predicated region
            $region91: #{tpu_custom_call.1} parent=89 // pred_check
              _
            $region92: #{tpu_custom_call.1} parent=89 // pred_check_branch
              %2070 = sbr.rel (0) target = $region94
            $region93: #{tpu_custom_call.1} parent=89 // pred_region
              // Predicated region
              $region106: #{tpu_custom_call.1} parent=93 // pred_check
                _
              $region107: #{tpu_custom_call.1} parent=93 // pred_check_branch
                %2100 = sbr.rel (0) target = $region109
              $region108: #{tpu_custom_call.1} parent=93 // pred_region
                loop: start=0, step=1, limit=1
                $region110: #{tpu_custom_call.1} parent=108 // loop_pre_header
                  _
                $region111: #{tpu_custom_call.1} parent=108 // loop_header
                  %s2102 = sphi 0, %s2106
                  %p2103 = scmp.ge.s32.totalorder %s2102, 1
                  %s2107 = sphi %s2061, %s2061
                  %s2108 = sphi %s2066, %s2066
                $region112: #{tpu_custom_call.1} parent=108 // loop_header_branch
                  %2105 = sbr.rel (%p2103) target = $region116
                $region113: #{tpu_custom_call.1} parent=108 // loop_body
                  %v2109 = vld [vmem:[%s2107] sm:$0xff]
                  %2110 = vst [vmem:[%s2108] sm:$0xff] %v2109
                  %v2111 = vld [vmem:[%s2107 + $0x8] sm:$0xff]
                  %2112 = vst [vmem:[%s2108 + $0x10] sm:$0xff] %v2111
                  %v2113 = vld [vmem:[%s2107 + $0x10] sm:$0xff]
                  %2114 = vst [vmem:[%s2108 + $0x20] sm:$0xff] %v2113
                  %v2115 = vld [vmem:[%s2107 + $0x18] sm:$0xff]
                  %2116 = vst [vmem:[%s2108 + $0x30] sm:$0xff] %v2115
                  %v2117 = vld [vmem:[%s2107 + $0x20] sm:$0xff]
                  %2118 = vst [vmem:[%s2108 + $0x40] sm:$0xff] %v2117
                  %v2119 = vld [vmem:[%s2107 + $0x28] sm:$0xff]
                  %2120 = vst [vmem:[%s2108 + $0x50] sm:$0xff] %v2119
                  %v2121 = vld [vmem:[%s2107 + $0x30] sm:$0xff]
                  %2122 = vst [vmem:[%s2108 + $0x60] sm:$0xff] %v2121
                  %v2123 = vld [vmem:[%s2107 + $0x38] sm:$0xff]
                  %2124 = vst [vmem:[%s2108 + $0x70] sm:$0xff] %v2123
                $region114: #{tpu_custom_call.1} parent=108 // loop_footer
                  %s2106 = sadd.s32 1, %s2102
                $region115: #{tpu_custom_call.1} parent=108 // loop_footer_branch
                  %2101 = sbr.rel target = $region111
                $region116: #{tpu_custom_call.1} parent=108 // loop_exit
                  _
              $region109: #{tpu_custom_call.1} parent=93 // pred_fallthru
                _
              // Predicated region
              $region117: #{tpu_custom_call.1} parent=93 // pred_check
                _
              $region118: #{tpu_custom_call.1} parent=93 // pred_check_branch
                %2126 = sbr.rel target = $region120
              $region119: #{tpu_custom_call.1} parent=93 // pred_region
                _
              $region120: #{tpu_custom_call.1} parent=93 // pred_fallthru
                _
            $region94: #{tpu_custom_call.1} parent=89 // pred_fallthru
              _
            // Predicated region
            $region95: #{tpu_custom_call.1} parent=89 // pred_check
              _
            $region96: #{tpu_custom_call.1} parent=89 // pred_check_branch
              %2072 = sbr.rel target = $region98
            $region97: #{tpu_custom_call.1} parent=89 // pred_region
              %s2074 = ssub.s32 256, 1
              loop: start=0, step=1, limit=1
              $region99: #{tpu_custom_call.1} parent=97 // loop_pre_header
                _
              $region100: #{tpu_custom_call.1} parent=97 // loop_header
                %s2076 = sphi 0, %s2080
                %p2077 = scmp.ge.s32.totalorder %s2076, 1
                %s2081 = sphi %s2061, %s2061
                %s2082 = sphi %s2066, %s2066
              $region101: #{tpu_custom_call.1} parent=97 // loop_header_branch
                %2079 = sbr.rel (%p2077) target = $region105
              $region102: #{tpu_custom_call.1} parent=97 // loop_body
                %v2083 = vld [vmem:[%s2081] sm:%s2074]
                %2084 = vst [vmem:[%s2082] sm:%s2074] %v2083
                %v2085 = vld [vmem:[%s2081 + $0x8] sm:%s2074]
                %2086 = vst [vmem:[%s2082 + $0x10] sm:%s2074] %v2085
                %v2087 = vld [vmem:[%s2081 + $0x10] sm:%s2074]
                %2088 = vst [vmem:[%s2082 + $0x20] sm:%s2074] %v2087
                %v2089 = vld [vmem:[%s2081 + $0x18] sm:%s2074]
                %2090 = vst [vmem:[%s2082 + $0x30] sm:%s2074] %v2089
                %v2091 = vld [vmem:[%s2081 + $0x20] sm:%s2074]
                %2092 = vst [vmem:[%s2082 + $0x40] sm:%s2074] %v2091
                %v2093 = vld [vmem:[%s2081 + $0x28] sm:%s2074]
                %2094 = vst [vmem:[%s2082 + $0x50] sm:%s2074] %v2093
                %v2095 = vld [vmem:[%s2081 + $0x30] sm:%s2074]
                %2096 = vst [vmem:[%s2082 + $0x60] sm:%s2074] %v2095
                %v2097 = vld [vmem:[%s2081 + $0x38] sm:%s2074]
                %2098 = vst [vmem:[%s2082 + $0x70] sm:%s2074] %v2097
              $region103: #{tpu_custom_call.1} parent=97 // loop_footer
                %s2080 = sadd.s32 1, %s2076
              $region104: #{tpu_custom_call.1} parent=97 // loop_footer_branch
                %2075 = sbr.rel target = $region100
              $region105: #{tpu_custom_call.1} parent=97 // loop_exit
                _
            $region98: #{tpu_custom_call.1} parent=89 // pred_fallthru
              _
          $region90: #{tpu_custom_call.1} parent=85 // pred_fallthru
            _
          %2127 = vnop
        $region86: #{tpu_custom_call.1} parent=77 // pred_fallthru
          _
      $region78: #{tpu_custom_call.1} parent=5 // pred_fallthru
        _
      %p2128 = scmp.le.s32.totalorder 2, %s12
      // Predicated region
      $region121: #{tpu_custom_call.1} parent=5 // pred_check
        %p2129 = pneg %p2128
      $region122: #{tpu_custom_call.1} parent=5 // pred_check_branch
        %2131 = sbr.rel (%p2129) target = $region124
      $region123: #{tpu_custom_call.1} parent=5 // pred_region
        %s2132 = ssub.s32 %s12, 2
        // Predicated region
        $region125: #{tpu_custom_call.1} parent=123 // pred_check
          %p2133 = pneg %p172
        $region126: #{tpu_custom_call.1} parent=123 // pred_check_branch
          %2135 = sbr.rel (%p2133) target = $region128
        $region127: #{tpu_custom_call.1} parent=123 // pred_region
          %s2136 = sand.u32 %s157, 1
          %s2137 = sand.u32 %s157, 1
          %s2138 = smul.addr %s2137, 64
          %s2139 = scalar_lea.vmem [#allocation8], %s2138
        $region128: #{tpu_custom_call.1} parent=123 // pred_fallthru
          _
      $region124: #{tpu_custom_call.1} parent=5 // pred_fallthru
        _
    $region6: #{tpu_custom_call.1} parent=1 // loop_footer
      %s16 = sadd.s32 1, %s12
    $region7: #{tpu_custom_call.1} parent=1 // loop_footer_branch
      %11 = sbr.rel target = $region3
    $region8: #{tpu_custom_call.1} parent=1 // loop_exit
      _

</llo_original>
